<compile_context>
chip_gen: v7x
topology: tpu7x:2x2x1
jax: 0.10.0
libtpu: 0.0.40
codegen_flags: <defaults>
</compile_context>

<pallas_src>
import jax
import jax.numpy as jnp
from jax.experimental import pallas as pl
from jax.experimental.pallas import tpu as pltpu


def _round_up(x, m):
    return (x + m - 1) // m * m


def _vmem_limit(*block_bytes):
    # double-buffered blocks + headroom, clamped to a budget valid on v5e..v7x.
    need = 3 * sum(block_bytes) + (2 << 20)
    return int(min(max(need, 16 << 20), 48 << 20))


# ----------------------------------------------------------------------------
# Pallas kernels
# ----------------------------------------------------------------------------
def _conv_matmul_stats_kernel(p_ref, w_ref, y_ref, stats_ref):
    # p: [TM, Kd] bf16   w: [Kd, Cp] bf16   y: [TM, Cp] f32   stats: [1, 2, Cp] f32
    y = jnp.dot(p_ref[...], w_ref[...], preferred_element_type=jnp.float32)
    y_ref[...] = y
    s = jnp.sum(y, axis=0, keepdims=True)          # padded rows are exact zeros
    sq = jnp.sum(y * y, axis=0, keepdims=True)
    stats_ref[...] = jnp.concatenate([s, sq], axis=0).reshape(stats_ref.shape)


def _bn_relu_kernel(y_ref, scale_ref, shift_ref, o_ref):
    # y: [TM, Cp]   scale/shift: [1, Cp]   o: [TM, Cp]
    o_ref[...] = jnp.maximum(y_ref[...] * scale_ref[...] + shift_ref[...], 0.0)


def _gru_kernel(x_ref, wih_ref, whh_ref, bih_ref, bhh_ref,
                mem_ref, hT_ref, gi_scr, h_scr):
    # Time-major: x [T, NB, I] bf16, wih [I, 3H] bf16, whh [H, 3H] f32,
    # biases [1, 3H] f32, mem [T, NB, H] f32, hT [NB, H] f32.
    T, NB, I = x_ref.shape
    H = hT_ref.shape[1]

    # Hoisted input projection: ONE [T*NB, I] @ [I, 3H] MXU matmul for all steps.
    gi = jnp.dot(x_ref[...].reshape(T * NB, I), wih_ref[...],
                 preferred_element_type=jnp.float32)
    gi_scr[...] = gi.reshape(T, NB, 3 * H) + bih_ref[...][None]
    h_scr[...] = jnp.zeros_like(h_scr)

    def step(t, carry):
        h = h_scr[...]
        gi_t = gi_scr[t]                                              # [NB, 3H]
        gh = jnp.dot(h, whh_ref[...],
                     preferred_element_type=jnp.float32) + bhh_ref[...]
        # PyTorch GRU gate order: r, z, n
        r = jax.nn.sigmoid(gi_t[:, 0 * H:1 * H] + gh[:, 0 * H:1 * H])
        z = jax.nn.sigmoid(gi_t[:, 1 * H:2 * H] + gh[:, 1 * H:2 * H])
        n = jnp.tanh(gi_t[:, 2 * H:3 * H] + r * gh[:, 2 * H:3 * H])
        h_new = (1.0 - z) * n + z * h
        h_scr[...] = h_new
        mem_ref[t] = h_new
        return carry

    jax.lax.fori_loop(0, T, step, 0, unroll=True if T <= 16 else 8)
    hT_ref[...] = h_scr[...]


# ----------------------------------------------------------------------------
# Pallas wrappers
# ----------------------------------------------------------------------------
def conv_bn_relu(patches, wmat, gamma, beta, m_valid):
    """Fused conv(im2col matmul) + BatchNorm(batch stats) + ReLU.

    patches: [M, Kd] f32, wmat: [Kd, Cout] f32 -> [M, Cout] f32.
    """
    M, Kd = patches.shape
    Cout = wmat.shape[1]
    Cp = _round_up(Cout, 128)               # lane-dense output channels
    TM = min(1024, _round_up(M, 8))         # row tile (clipped for small M)
    Mp = _round_up(M, TM)
    nt = Mp // TM

    patches_p = jnp.pad(patches.astype(jnp.bfloat16), ((0, Mp - M), (0, 0)))
    w_p = jnp.pad(wmat.astype(jnp.bfloat16), ((0, 0), (0, Cp - Cout)))

    cost = pl.CostEstimate(
        flops=2 * Mp * Kd * Cp, transcendentals=0,
        bytes_accessed=patches_p.size * 2 + w_p.size * 2
        + Mp * Cp * 4 + nt * 2 * Cp * 4)

    # Pass 1: matmul + per-tile partial BN statistics (fully parallel grid).
    y, part_stats = pl.pallas_call(
        _conv_matmul_stats_kernel,
        out_shape=(jax.ShapeDtypeStruct((Mp, Cp), jnp.float32),
                   jax.ShapeDtypeStruct((nt, 2, Cp), jnp.float32)),
        grid=(nt,),
        in_specs=[pl.BlockSpec((TM, Kd), lambda i: (i, 0)),
                  pl.BlockSpec((Kd, Cp), lambda i: (0, 0))],
        out_specs=(pl.BlockSpec((TM, Cp), lambda i: (i, 0)),
                   pl.BlockSpec((1, 2, Cp), lambda i: (i, 0, 0))),
        compiler_params=pltpu.CompilerParams(
            dimension_semantics=("parallel",),
            vmem_limit_bytes=_vmem_limit(TM * Kd * 2, Kd * Cp * 2,
                                         TM * Cp * 4, 2 * Cp * 4)),
        cost_estimate=cost,
    )(patches_p, w_p)

    # Finalize BN batch statistics (training-mode forward, biased variance) on
    # tiny [Cp] vectors in plain JAX; fold gamma/beta into scale/shift.
    # Note: the conv bias is omitted entirely - BN's batch-mean subtraction
    # cancels it exactly, so semantics match the PyTorch module.
    psum = jnp.sum(part_stats[:, 0, :], axis=0)
    psq = jnp.sum(part_stats[:, 1, :], axis=0)
    mean = psum / m_valid
    var = jnp.maximum(psq / m_valid - mean * mean, 0.0)
    g = jnp.pad(gamma, (0, Cp - Cout))
    b = jnp.pad(beta, (0, Cp - Cout))
    scale = (g * jax.lax.rsqrt(var + 1e-5))[None, :]          # [1, Cp]
    shift = (b - mean * scale[0])[None, :]                    # [1, Cp]

    # Pass 2: lane-dense normalize + affine + ReLU (parallel grid).
    out = pl.pallas_call(
        _bn_relu_kernel,
        out_shape=jax.ShapeDtypeStruct((Mp, Cp), jnp.float32),
        grid=(nt,),
        in_specs=[pl.BlockSpec((TM, Cp), lambda i: (i, 0)),
                  pl.BlockSpec((1, Cp), lambda i: (0, 0)),
                  pl.BlockSpec((1, Cp), lambda i: (0, 0))],
        out_specs=pl.BlockSpec((TM, Cp), lambda i: (i, 0)),
        compiler_params=pltpu.CompilerParams(
            dimension_semantics=("parallel",),
            vmem_limit_bytes=_vmem_limit(TM * Cp * 4, TM * Cp * 4)),
    )(y, scale, shift)
    return out[:M, :Cout]


def gru_forward(x, wih_t, whh_t, bih, bhh):
    """x: [N, T, I] -> (memory [N, T, H], h_T [N, H]); single-layer GRU, h0=0."""
    N, T, I = x.shape
    H = whh_t.shape[0]
    NB = N if N <= 8 else 8
    Np = _round_up(N, NB)
    nb = Np // NB

    xt = jnp.transpose(x, (1, 0, 2)).astype(jnp.bfloat16)     # time-major
    xt = jnp.pad(xt, ((0, 0), (0, Np - N), (0, 0)))

    cost = pl.CostEstimate(
        flops=2 * T * Np * I * 3 * H + 2 * T * Np * H * 3 * H,
        transcendentals=3 * T * Np * H,
        bytes_accessed=xt.size * 2 + I * 3 * H * 2 + H * 3 * H * 4
        + T * Np * H * 4 + Np * H * 4)

    mem_t, hT = pl.pallas_call(
        _gru_kernel,
        out_shape=(jax.ShapeDtypeStruct((T, Np, H), jnp.float32),
                   jax.ShapeDtypeStruct((Np, H), jnp.float32)),
        grid=(nb,),
        in_specs=[pl.BlockSpec((T, NB, I), lambda b: (0, b, 0)),
                  pl.BlockSpec((I, 3 * H), lambda b: (0, 0)),
                  pl.BlockSpec((H, 3 * H), lambda b: (0, 0)),
                  pl.BlockSpec((1, 3 * H), lambda b: (0, 0)),
                  pl.BlockSpec((1, 3 * H), lambda b: (0, 0))],
        out_specs=(pl.BlockSpec((T, NB, H), lambda b: (0, b, 0)),
                   pl.BlockSpec((NB, H), lambda b: (b, 0))),
        scratch_shapes=[pltpu.VMEM((T, NB, 3 * H), jnp.float32),
                        pltpu.VMEM((NB, H), jnp.float32)],
        compiler_params=pltpu.CompilerParams(
            dimension_semantics=("parallel",),
            vmem_limit_bytes=_vmem_limit(T * NB * I * 2, I * 3 * H * 2,
                                         H * 3 * H * 4, T * NB * H * 4,
                                         T * NB * 3 * H * 4)),
        cost_estimate=cost,
    )(xt, wih_t.astype(jnp.bfloat16), whh_t, bih, bhh)

    memory = jnp.transpose(mem_t[:, :N, :], (1, 0, 2))        # [N, T, H]
    return memory, hT[:N]


# ----------------------------------------------------------------------------
# Plain-JAX glue (AddCoords, NHWC im2col, parameter setup)
# ----------------------------------------------------------------------------
def add_coords_nhwc(x):
    """CoordConv AddCoords (rank=2, with_r=True) on NHWC input."""
    N, H, W, _ = x.shape
    xx = jnp.broadcast_to(jnp.arange(H, dtype=jnp.float32)[:, None], (H, W))
    yy = jnp.broadcast_to(jnp.arange(W, dtype=jnp.float32)[None, :], (H, W))
    xx = xx / (H - 1) * 2.0 - 1.0
    yy = yy / (W - 1) * 2.0 - 1.0
    rr = jnp.sqrt(jnp.square(xx - 0.5) + jnp.square(yy - 0.5))
    coords = jnp.broadcast_to(jnp.stack([xx, yy, rr], axis=-1)[None], (N, H, W, 3))
    return jnp.concatenate([x, coords], axis=-1)


def im2col_nhwc(x, kh, kw, stride, pad):
    """NHWC -> patches [N*Hout*Wout, kh*kw*C]  ((kh,kw)-major, C minor)."""
    N, H, W, C = x.shape
    Hout = (H - kh + 2 * pad) // stride + 1
    Wout = (W - kw + 2 * pad) // stride + 1
    xp = jnp.pad(x, ((0, 0), (pad, pad), (pad, pad), (0, 0)))
    cols = []
    for i in range(kh):
        for j in range(kw):
            cols.append(xp[:, i:i + stride * Hout:stride,
                           j:j + stride * Wout:stride, :])
    patches = jnp.concatenate(cols, axis=-1)                  # [N,Hout,Wout,kh*kw*C]
    M = N * Hout * Wout
    return patches.reshape(M, kh * kw * C), Hout, Wout, M


def init_params(key, n_mel_channels, ref_enc_filters, gru_size):
    K = len(ref_enc_filters)
    filters = [1] + list(ref_enc_filters)
    keys = jax.random.split(key, K + 2)
    convs = []
    for k in range(K):
        cin = filters[k] + 3 if k == 0 else filters[k]        # CoordConv adds x,y,r
        cout = filters[k + 1]
        w = 0.1 * jax.random.normal(keys[k], (cout, cin, 3, 3), jnp.float32)
        gamma = jnp.ones((cout,), jnp.float32)
        beta = jnp.zeros((cout,), jnp.float32)
        convs.append((w, gamma, beta))                        # conv bias dropped (BN cancels it)
    out_ch = n_mel_channels
    for _ in range(K):
        out_ch = (out_ch - 3 + 2 * 1) // 2 + 1
    gru_in = ref_enc_filters[-1] * out_ch
    wih = 0.1 * jax.random.normal(keys[K], (3 * gru_size, gru_in), jnp.float32)
    whh = 0.1 * jax.random.normal(keys[K + 1], (3 * gru_size, gru_size), jnp.float32)
    bih = jnp.zeros((1, 3 * gru_size), jnp.float32)
    bhh = jnp.zeros((1, 3 * gru_size), jnp.float32)
    return {"convs": convs, "gru": (wih, whh, bih, bhh)}


def reference_encoder_forward(inputs, params, n_mel_channels):
    """inputs: [N, Ty, n_mels] -> (memory [N, T', H_gru], h [N, H_gru])"""
    N = inputs.shape[0]
    out = inputs.reshape(N, -1, n_mel_channels, 1)            # NHWC, C=1
    for k, (w, gamma, beta) in enumerate(params["convs"]):
        if k == 0:
            out = add_coords_nhwc(out)                        # CoordConv2d (with_r=True)
        patches, Hout, Wout, M = im2col_nhwc(out, 3, 3, 2, 1)
        cout = w.shape[0]
        # Reorder PyTorch OIHW weight once to match the (kh,kw,Cin)-major patches.
        wmat = jnp.transpose(w, (2, 3, 1, 0)).reshape(-1, cout)
        y = conv_bn_relu(patches, wmat, gamma, beta, M)       # fused conv+BN+ReLU
        out = y.reshape(N, Hout, Wout, cout)                  # stays NHWC, no transpose

    # PyTorch: NCHW -> transpose(1,2) -> flatten (C, W') per step.  NHWC gives
    # [N, T', W', C] -> flatten (W', C); reorder the GRU input weight to match.
    T = out.shape[1]
    W_last, C_last = out.shape[2], out.shape[3]
    x = out.reshape(N, T, -1)
    # TODO(synk): optional `mask` (masked_fill before the GRU) not implemented; mask=None path only.
    wih, whh, bih, bhh = params["gru"]
    wih_nhwc = wih.reshape(-1, C_last, W_last).transpose(0, 2, 1).reshape(wih.shape[0], -1)
    memory, h = gru_forward(x, wih_nhwc.T, whh.T, bih, bhh)
    return memory, h


# ----------------------------------------------------------------------------
# Pure-JAX (f32, NCHW) reference of the PyTorch module, for a numerical check.
# ----------------------------------------------------------------------------
def reference_forward_jax(inputs, params, n_mel_channels):
    N = inputs.shape[0]
    x = inputs.reshape(N, 1, -1, n_mel_channels)              # NCHW
    for k, (w, gamma, beta) in enumerate(params["convs"]):
        if k == 0:
            _, _, H, W = x.shape
            xx = jnp.broadcast_to(jnp.arange(H, dtype=jnp.float32)[:, None], (H, W))
            yy = jnp.broadcast_to(jnp.arange(W, dtype=jnp.float32)[None, :], (H, W))
            xx = xx / (H - 1) * 2.0 - 1.0
            yy = yy / (W - 1) * 2.0 - 1.0
            rr = jnp.sqrt(jnp.square(xx - 0.5) + jnp.square(yy - 0.5))
            coords = jnp.broadcast_to(jnp.stack([xx, yy, rr], 0)[None], (N, 3, H, W))
            x = jnp.concatenate([x, coords], axis=1)
        y = jax.lax.conv_general_dilated(
            x, w, window_strides=(2, 2), padding=((1, 1), (1, 1)),
            dimension_numbers=("NCHW", "OIHW", "NCHW"))
        mean = jnp.mean(y, axis=(0, 2, 3), keepdims=True)
        var = jnp.mean(jnp.square(y - mean), axis=(0, 2, 3), keepdims=True)
        y = (y - mean) * jax.lax.rsqrt(var + 1e-5)
        x = jnp.maximum(y * gamma[None, :, None, None] + beta[None, :, None, None], 0.0)
    x = jnp.transpose(x, (0, 2, 1, 3))
    T = x.shape[1]
    x = x.reshape(N, T, -1)
    wih, whh, bih, bhh = params["gru"]
    H = whh.shape[1]
    h = jnp.zeros((N, H), jnp.float32)
    mems = []
    for t in range(T):
        gi = x[:, t] @ wih.T + bih
        gh = h @ whh.T + bhh
        r = jax.nn.sigmoid(gi[:, :H] + gh[:, :H])
        z = jax.nn.sigmoid(gi[:, H:2 * H] + gh[:, H:2 * H])
        n = jnp.tanh(gi[:, 2 * H:] + r * gh[:, 2 * H:])
        h = (1.0 - z) * n + z * h
        mems.append(h)
    return jnp.stack(mems, axis=1), h


# ----------------------------------------------------------------------------
if __name__ == "__main__":
    # Small config mirroring the module's hyper-params:
    #   encoder_hidden E = 32, n_mel_channels = 16,
    #   ref_enc_filters = [4, 8, 16], kernel 3, stride 2, pad 1,
    #   ref_enc_gru_size = E // 2 = 16
    n_mel_channels = 16
    ref_enc_filters = [4, 8, 16]
    gru_size = 16
    N, Ty = 2, 16

    key = jax.random.PRNGKey(0)
    k_in, k_par = jax.random.split(key)
    inputs = jax.random.normal(k_in, (N, Ty, n_mel_channels), jnp.float32)
    params = init_params(k_par, n_mel_channels, ref_enc_filters, gru_size)

    fwd = jax.jit(lambda x: reference_encoder_forward(x, params, n_mel_channels))
    memory, h = fwd(inputs)
    memory = jax.block_until_ready(memory)
    h = jax.block_until_ready(h)

    assert memory.shape == (N, 2, gru_size), memory.shape     # T' = 16 -> 8 -> 4 -> 2
    assert h.shape == (N, gru_size), h.shape
    assert jnp.all(jnp.isfinite(memory)) and jnp.all(jnp.isfinite(h))

    # Numerical check vs the f32 pure-JAX reference (bf16 matmul tolerance).
    mem_ref, h_ref = reference_forward_jax(inputs, params, n_mel_channels)
    assert bool(jnp.allclose(memory, mem_ref, atol=7.5e-2, rtol=7.5e-2))
    assert bool(jnp.allclose(h, h_ref, atol=7.5e-2, rtol=7.5e-2))

    print("KERNEL_OK")
</pallas_src>

<mosaic_0001>
module attributes {stable_mosaic.version = 11 : i64} {
  func.func @_conv_matmul_stats_kernel(%arg0: i32, %arg1: memref<128x36xbf16, #tpu.memory_space<vmem>>, %arg2: memref<36x128xbf16, #tpu.memory_space<vmem>>, %arg3: memref<128x128xf32, #tpu.memory_space<vmem>>, %arg4: memref<1x2x128xf32, #tpu.memory_space<vmem>>) attributes {dimension_semantics = [#tpu.dimension_semantics<parallel>], iteration_bounds = array<i64: 1>, scalar_prefetch = 0 : i64, scratch_operands = 0 : i64, tpu.core_type = #tpu.core_type<tc>, window_params = [{transform_indices = @transform_0, window_bounds = array<i64: 128, 36>}, {pipeline_mode = #tpu.pipeline_mode<synchronous>, transform_indices = @transform_1, window_bounds = array<i64: 36, 128>}, {transform_indices = @transform_2, window_bounds = array<i64: 128, 128>}, {transform_indices = @transform_3, window_bounds = array<i64: 1, 2, 128>}]} {
    %c0 = arith.constant 0 : index
    %c0_0 = arith.constant 0 : index
    %0 = vector.load %arg1[%c0, %c0_0] : memref<128x36xbf16, #tpu.memory_space<vmem>>, vector<128x36xbf16>
    %c0_1 = arith.constant 0 : index
    %c0_2 = arith.constant 0 : index
    %1 = vector.load %arg2[%c0_1, %c0_2] : memref<36x128xbf16, #tpu.memory_space<vmem>>, vector<36x128xbf16>
    %cst = arith.constant dense<0.000000e+00> : vector<128x128xf32>
    %2 = tpu.matmul %0, %1, %cst {dimension_numbers = #tpu.dot_dimension_numbers<[1], [0], [0], [1], [0, 0, 1, 1], [], []>} : vector<128x36xbf16>, vector<36x128xbf16>, vector<128x128xf32> -> vector<128x128xf32>
    %c0_3 = arith.constant 0 : index
    %c0_4 = arith.constant 0 : index
    %3 = vector.load %arg3[%c0_3, %c0_4] : memref<128x128xf32, #tpu.memory_space<vmem>>, vector<128x128xf32>
    tpu.vector_store %arg3[%c0_3, %c0_4], %2 {strides = array<i32>} : memref<128x128xf32, #tpu.memory_space<vmem>>, vector<128x128xf32>,
    %cst_5 = arith.constant dense<0.000000e+00> : vector<128xf32>
    %4 = vector.multi_reduction <add>, %2, %cst_5 [0] : vector<128x128xf32> to vector<128xf32>
    %5 = vector.shape_cast %4 : vector<128xf32> to vector<1x128xf32>
    %6 = arith.mulf %2, %2 : vector<128x128xf32>
    %cst_6 = arith.constant dense<0.000000e+00> : vector<128xf32>
    %7 = vector.multi_reduction <add>, %6, %cst_6 [0] : vector<128x128xf32> to vector<128xf32>
    %8 = vector.shape_cast %7 : vector<128xf32> to vector<1x128xf32>
    %9 = tpu.concatenate %5, %8 in 0 : vector<1x128xf32>, vector<1x128xf32> -> vector<2x128xf32>
    %10 = vector.shape_cast %9 : vector<2x128xf32> to vector<1x2x128xf32>
    %c0_7 = arith.constant 0 : index
    %c0_8 = arith.constant 0 : index
    %c0_9 = arith.constant 0 : index
    %11 = vector.load %arg4[%c0_7, %c0_8, %c0_9] : memref<1x2x128xf32, #tpu.memory_space<vmem>>, vector<1x2x128xf32>
    tpu.vector_store %arg4[%c0_7, %c0_8, %c0_9], %10 {strides = array<i32>} : memref<1x2x128xf32, #tpu.memory_space<vmem>>, vector<1x2x128xf32>,
    return
  }
  func.func @transform_0(%arg0: i32) -> (i32, i32) {
    %c0_i32 = arith.constant 0 : i32
    %c0_i32_0 = arith.constant 0 : i32
    return %arg0, %c0_i32 : i32, i32
  }
  func.func @transform_1(%arg0: i32) -> (i32, i32) {
    %c0_i32 = arith.constant 0 : i32
    %c0_i32_0 = arith.constant 0 : i32
    %c0_i32_1 = arith.constant 0 : i32
    return %c0_i32, %c0_i32_0 : i32, i32
  }
  func.func @transform_2(%arg0: i32) -> (i32, i32) {
    %c0_i32 = arith.constant 0 : i32
    %c0_i32_0 = arith.constant 0 : i32
    return %arg0, %c0_i32 : i32, i32
  }
  func.func @transform_3(%arg0: i32) -> (i32, i32, i32) {
    %c0_i32 = arith.constant 0 : i32
    %c0_i32_0 = arith.constant 0 : i32
    %c0_i32_1 = arith.constant 0 : i32
    return %arg0, %c0_i32, %c0_i32_0 : i32, i32, i32
  }
}

module attributes {stable_mosaic.version = 11 : i64} {
  func.func @_bn_relu_kernel(%arg0: i32, %arg1: memref<128x128xf32, #tpu.memory_space<vmem>>, %arg2: memref<1x128xf32, #tpu.memory_space<vmem>>, %arg3: memref<1x128xf32, #tpu.memory_space<vmem>>, %arg4: memref<128x128xf32, #tpu.memory_space<vmem>>) attributes {dimension_semantics = [#tpu.dimension_semantics<parallel>], iteration_bounds = array<i64: 1>, scalar_prefetch = 0 : i64, scratch_operands = 0 : i64, tpu.core_type = #tpu.core_type<tc>, window_params = [{transform_indices = @transform_0, window_bounds = array<i64: 128, 128>}, {pipeline_mode = #tpu.pipeline_mode<synchronous>, transform_indices = @transform_1, window_bounds = array<i64: 1, 128>}, {pipeline_mode = #tpu.pipeline_mode<synchronous>, transform_indices = @transform_2, window_bounds = array<i64: 1, 128>}, {transform_indices = @transform_3, window_bounds = array<i64: 128, 128>}]} {
    %c0 = arith.constant 0 : index
    %c0_0 = arith.constant 0 : index
    %0 = vector.load %arg1[%c0, %c0_0] : memref<128x128xf32, #tpu.memory_space<vmem>>, vector<128x128xf32>
    %c0_1 = arith.constant 0 : index
    %c0_2 = arith.constant 0 : index
    %1 = vector.load %arg2[%c0_1, %c0_2] : memref<1x128xf32, #tpu.memory_space<vmem>>, vector<1x128xf32>
    %2 = vector.broadcast %1 : vector<1x128xf32> to vector<128x128xf32>
    %3 = arith.mulf %0, %2 : vector<128x128xf32>
    %c0_3 = arith.constant 0 : index
    %c0_4 = arith.constant 0 : index
    %4 = vector.load %arg3[%c0_3, %c0_4] : memref<1x128xf32, #tpu.memory_space<vmem>>, vector<1x128xf32>
    %5 = vector.broadcast %4 : vector<1x128xf32> to vector<128x128xf32>
    %6 = arith.addf %3, %5 : vector<128x128xf32>
    %cst = arith.constant 0.000000e+00 : f32
    %7 = vector.broadcast %cst : f32 to vector<128x128xf32>
    %8 = arith.maximumf %6, %7 : vector<128x128xf32>
    %c0_5 = arith.constant 0 : index
    %c0_6 = arith.constant 0 : index
    %9 = vector.load %arg4[%c0_5, %c0_6] : memref<128x128xf32, #tpu.memory_space<vmem>>, vector<128x128xf32>
    tpu.vector_store %arg4[%c0_5, %c0_6], %8 {strides = array<i32>} : memref<128x128xf32, #tpu.memory_space<vmem>>, vector<128x128xf32>,
    return
  }
  func.func @transform_0(%arg0: i32) -> (i32, i32) {
    %c0_i32 = arith.constant 0 : i32
    %c0_i32_0 = arith.constant 0 : i32
    return %arg0, %c0_i32 : i32, i32
  }
  func.func @transform_1(%arg0: i32) -> (i32, i32) {
    %c0_i32 = arith.constant 0 : i32
    %c0_i32_0 = arith.constant 0 : i32
    %c0_i32_1 = arith.constant 0 : i32
    return %c0_i32, %c0_i32_0 : i32, i32
  }
  func.func @transform_2(%arg0: i32) -> (i32, i32) {
    %c0_i32 = arith.constant 0 : i32
    %c0_i32_0 = arith.constant 0 : i32
    %c0_i32_1 = arith.constant 0 : i32
    return %c0_i32, %c0_i32_0 : i32, i32
  }
  func.func @transform_3(%arg0: i32) -> (i32, i32) {
    %c0_i32 = arith.constant 0 : i32
    %c0_i32_0 = arith.constant 0 : i32
    return %arg0, %c0_i32 : i32, i32
  }
}

module attributes {stable_mosaic.version = 11 : i64} {
  func.func @_conv_matmul_stats_kernel(%arg0: i32, %arg1: memref<32x36xbf16, #tpu.memory_space<vmem>>, %arg2: memref<36x128xbf16, #tpu.memory_space<vmem>>, %arg3: memref<32x128xf32, #tpu.memory_space<vmem>>, %arg4: memref<1x2x128xf32, #tpu.memory_space<vmem>>) attributes {dimension_semantics = [#tpu.dimension_semantics<parallel>], iteration_bounds = array<i64: 1>, scalar_prefetch = 0 : i64, scratch_operands = 0 : i64, tpu.core_type = #tpu.core_type<tc>, window_params = [{transform_indices = @transform_0, window_bounds = array<i64: 32, 36>}, {pipeline_mode = #tpu.pipeline_mode<synchronous>, transform_indices = @transform_1, window_bounds = array<i64: 36, 128>}, {transform_indices = @transform_2, window_bounds = array<i64: 32, 128>}, {transform_indices = @transform_3, window_bounds = array<i64: 1, 2, 128>}]} {
    %c0 = arith.constant 0 : index
    %c0_0 = arith.constant 0 : index
    %0 = vector.load %arg1[%c0, %c0_0] : memref<32x36xbf16, #tpu.memory_space<vmem>>, vector<32x36xbf16>
    %c0_1 = arith.constant 0 : index
    %c0_2 = arith.constant 0 : index
    %1 = vector.load %arg2[%c0_1, %c0_2] : memref<36x128xbf16, #tpu.memory_space<vmem>>, vector<36x128xbf16>
    %cst = arith.constant dense<0.000000e+00> : vector<32x128xf32>
    %2 = tpu.matmul %0, %1, %cst {dimension_numbers = #tpu.dot_dimension_numbers<[1], [0], [0], [1], [0, 0, 1, 1], [], []>} : vector<32x36xbf16>, vector<36x128xbf16>, vector<32x128xf32> -> vector<32x128xf32>
    %c0_3 = arith.constant 0 : index
    %c0_4 = arith.constant 0 : index
    %3 = vector.load %arg3[%c0_3, %c0_4] : memref<32x128xf32, #tpu.memory_space<vmem>>, vector<32x128xf32>
    tpu.vector_store %arg3[%c0_3, %c0_4], %2 {strides = array<i32>} : memref<32x128xf32, #tpu.memory_space<vmem>>, vector<32x128xf32>,
    %cst_5 = arith.constant dense<0.000000e+00> : vector<128xf32>
    %4 = vector.multi_reduction <add>, %2, %cst_5 [0] : vector<32x128xf32> to vector<128xf32>
    %5 = vector.shape_cast %4 : vector<128xf32> to vector<1x128xf32>
    %6 = arith.mulf %2, %2 : vector<32x128xf32>
    %cst_6 = arith.constant dense<0.000000e+00> : vector<128xf32>
    %7 = vector.multi_reduction <add>, %6, %cst_6 [0] : vector<32x128xf32> to vector<128xf32>
    %8 = vector.shape_cast %7 : vector<128xf32> to vector<1x128xf32>
    %9 = tpu.concatenate %5, %8 in 0 : vector<1x128xf32>, vector<1x128xf32> -> vector<2x128xf32>
    %10 = vector.shape_cast %9 : vector<2x128xf32> to vector<1x2x128xf32>
    %c0_7 = arith.constant 0 : index
    %c0_8 = arith.constant 0 : index
    %c0_9 = arith.constant 0 : index
    %11 = vector.load %arg4[%c0_7, %c0_8, %c0_9] : memref<1x2x128xf32, #tpu.memory_space<vmem>>, vector<1x2x128xf32>
    tpu.vector_store %arg4[%c0_7, %c0_8, %c0_9], %10 {strides = array<i32>} : memref<1x2x128xf32, #tpu.memory_space<vmem>>, vector<1x2x128xf32>,
    return
  }
  func.func @transform_0(%arg0: i32) -> (i32, i32) {
    %c0_i32 = arith.constant 0 : i32
    %c0_i32_0 = arith.constant 0 : i32
    return %arg0, %c0_i32 : i32, i32
  }
  func.func @transform_1(%arg0: i32) -> (i32, i32) {
    %c0_i32 = arith.constant 0 : i32
    %c0_i32_0 = arith.constant 0 : i32
    %c0_i32_1 = arith.constant 0 : i32
    return %c0_i32, %c0_i32_0 : i32, i32
  }
  func.func @transform_2(%arg0: i32) -> (i32, i32) {
    %c0_i32 = arith.constant 0 : i32
    %c0_i32_0 = arith.constant 0 : i32
    return %arg0, %c0_i32 : i32, i32
  }
  func.func @transform_3(%arg0: i32) -> (i32, i32, i32) {
    %c0_i32 = arith.constant 0 : i32
    %c0_i32_0 = arith.constant 0 : i32
    %c0_i32_1 = arith.constant 0 : i32
    return %arg0, %c0_i32, %c0_i32_0 : i32, i32, i32
  }
}

module attributes {stable_mosaic.version = 11 : i64} {
  func.func @_bn_relu_kernel(%arg0: i32, %arg1: memref<32x128xf32, #tpu.memory_space<vmem>>, %arg2: memref<1x128xf32, #tpu.memory_space<vmem>>, %arg3: memref<1x128xf32, #tpu.memory_space<vmem>>, %arg4: memref<32x128xf32, #tpu.memory_space<vmem>>) attributes {dimension_semantics = [#tpu.dimension_semantics<parallel>], iteration_bounds = array<i64: 1>, scalar_prefetch = 0 : i64, scratch_operands = 0 : i64, tpu.core_type = #tpu.core_type<tc>, window_params = [{transform_indices = @transform_0, window_bounds = array<i64: 32, 128>}, {pipeline_mode = #tpu.pipeline_mode<synchronous>, transform_indices = @transform_1, window_bounds = array<i64: 1, 128>}, {pipeline_mode = #tpu.pipeline_mode<synchronous>, transform_indices = @transform_2, window_bounds = array<i64: 1, 128>}, {transform_indices = @transform_3, window_bounds = array<i64: 32, 128>}]} {
    %c0 = arith.constant 0 : index
    %c0_0 = arith.constant 0 : index
    %0 = vector.load %arg1[%c0, %c0_0] : memref<32x128xf32, #tpu.memory_space<vmem>>, vector<32x128xf32>
    %c0_1 = arith.constant 0 : index
    %c0_2 = arith.constant 0 : index
    %1 = vector.load %arg2[%c0_1, %c0_2] : memref<1x128xf32, #tpu.memory_space<vmem>>, vector<1x128xf32>
    %2 = vector.broadcast %1 : vector<1x128xf32> to vector<32x128xf32>
    %3 = arith.mulf %0, %2 : vector<32x128xf32>
    %c0_3 = arith.constant 0 : index
    %c0_4 = arith.constant 0 : index
    %4 = vector.load %arg3[%c0_3, %c0_4] : memref<1x128xf32, #tpu.memory_space<vmem>>, vector<1x128xf32>
    %5 = vector.broadcast %4 : vector<1x128xf32> to vector<32x128xf32>
    %6 = arith.addf %3, %5 : vector<32x128xf32>
    %cst = arith.constant 0.000000e+00 : f32
    %7 = vector.broadcast %cst : f32 to vector<32x128xf32>
    %8 = arith.maximumf %6, %7 : vector<32x128xf32>
    %c0_5 = arith.constant 0 : index
    %c0_6 = arith.constant 0 : index
    %9 = vector.load %arg4[%c0_5, %c0_6] : memref<32x128xf32, #tpu.memory_space<vmem>>, vector<32x128xf32>
    tpu.vector_store %arg4[%c0_5, %c0_6], %8 {strides = array<i32>} : memref<32x128xf32, #tpu.memory_space<vmem>>, vector<32x128xf32>,
    return
  }
  func.func @transform_0(%arg0: i32) -> (i32, i32) {
    %c0_i32 = arith.constant 0 : i32
    %c0_i32_0 = arith.constant 0 : i32
    return %arg0, %c0_i32 : i32, i32
  }
  func.func @transform_1(%arg0: i32) -> (i32, i32) {
    %c0_i32 = arith.constant 0 : i32
    %c0_i32_0 = arith.constant 0 : i32
    %c0_i32_1 = arith.constant 0 : i32
    return %c0_i32, %c0_i32_0 : i32, i32
  }
  func.func @transform_2(%arg0: i32) -> (i32, i32) {
    %c0_i32 = arith.constant 0 : i32
    %c0_i32_0 = arith.constant 0 : i32
    %c0_i32_1 = arith.constant 0 : i32
    return %c0_i32, %c0_i32_0 : i32, i32
  }
  func.func @transform_3(%arg0: i32) -> (i32, i32) {
    %c0_i32 = arith.constant 0 : i32
    %c0_i32_0 = arith.constant 0 : i32
    return %arg0, %c0_i32 : i32, i32
  }
}

module attributes {stable_mosaic.version = 11 : i64} {
  func.func @_conv_matmul_stats_kernel(%arg0: i32, %arg1: memref<8x72xbf16, #tpu.memory_space<vmem>>, %arg2: memref<72x128xbf16, #tpu.memory_space<vmem>>, %arg3: memref<8x128xf32, #tpu.memory_space<vmem>>, %arg4: memref<1x2x128xf32, #tpu.memory_space<vmem>>) attributes {dimension_semantics = [#tpu.dimension_semantics<parallel>], iteration_bounds = array<i64: 1>, scalar_prefetch = 0 : i64, scratch_operands = 0 : i64, tpu.core_type = #tpu.core_type<tc>, window_params = [{transform_indices = @transform_0, window_bounds = array<i64: 8, 72>}, {pipeline_mode = #tpu.pipeline_mode<synchronous>, transform_indices = @transform_1, window_bounds = array<i64: 72, 128>}, {transform_indices = @transform_2, window_bounds = array<i64: 8, 128>}, {transform_indices = @transform_3, window_bounds = array<i64: 1, 2, 128>}]} {
    %c0 = arith.constant 0 : index
    %c0_0 = arith.constant 0 : index
    %0 = vector.load %arg1[%c0, %c0_0] : memref<8x72xbf16, #tpu.memory_space<vmem>>, vector<8x72xbf16>
    %c0_1 = arith.constant 0 : index
    %c0_2 = arith.constant 0 : index
    %1 = vector.load %arg2[%c0_1, %c0_2] : memref<72x128xbf16, #tpu.memory_space<vmem>>, vector<72x128xbf16>
    %cst = arith.constant dense<0.000000e+00> : vector<8x128xf32>
    %2 = tpu.matmul %0, %1, %cst {dimension_numbers = #tpu.dot_dimension_numbers<[1], [0], [0], [1], [0, 0, 1, 1], [], []>} : vector<8x72xbf16>, vector<72x128xbf16>, vector<8x128xf32> -> vector<8x128xf32>
    %c0_3 = arith.constant 0 : index
    %c0_4 = arith.constant 0 : index
    %3 = vector.load %arg3[%c0_3, %c0_4] : memref<8x128xf32, #tpu.memory_space<vmem>>, vector<8x128xf32>
    tpu.vector_store %arg3[%c0_3, %c0_4], %2 {strides = array<i32>} : memref<8x128xf32, #tpu.memory_space<vmem>>, vector<8x128xf32>,
    %cst_5 = arith.constant dense<0.000000e+00> : vector<128xf32>
    %4 = vector.multi_reduction <add>, %2, %cst_5 [0] : vector<8x128xf32> to vector<128xf32>
    %5 = vector.shape_cast %4 : vector<128xf32> to vector<1x128xf32>
    %6 = arith.mulf %2, %2 : vector<8x128xf32>
    %cst_6 = arith.constant dense<0.000000e+00> : vector<128xf32>
    %7 = vector.multi_reduction <add>, %6, %cst_6 [0] : vector<8x128xf32> to vector<128xf32>
    %8 = vector.shape_cast %7 : vector<128xf32> to vector<1x128xf32>
    %9 = tpu.concatenate %5, %8 in 0 : vector<1x128xf32>, vector<1x128xf32> -> vector<2x128xf32>
    %10 = vector.shape_cast %9 : vector<2x128xf32> to vector<1x2x128xf32>
    %c0_7 = arith.constant 0 : index
    %c0_8 = arith.constant 0 : index
    %c0_9 = arith.constant 0 : index
    %11 = vector.load %arg4[%c0_7, %c0_8, %c0_9] : memref<1x2x128xf32, #tpu.memory_space<vmem>>, vector<1x2x128xf32>
    tpu.vector_store %arg4[%c0_7, %c0_8, %c0_9], %10 {strides = array<i32>} : memref<1x2x128xf32, #tpu.memory_space<vmem>>, vector<1x2x128xf32>,
    return
  }
  func.func @transform_0(%arg0: i32) -> (i32, i32) {
    %c0_i32 = arith.constant 0 : i32
    %c0_i32_0 = arith.constant 0 : i32
    return %arg0, %c0_i32 : i32, i32
  }
  func.func @transform_1(%arg0: i32) -> (i32, i32) {
    %c0_i32 = arith.constant 0 : i32
    %c0_i32_0 = arith.constant 0 : i32
    %c0_i32_1 = arith.constant 0 : i32
    return %c0_i32, %c0_i32_0 : i32, i32
  }
  func.func @transform_2(%arg0: i32) -> (i32, i32) {
    %c0_i32 = arith.constant 0 : i32
    %c0_i32_0 = arith.constant 0 : i32
    return %arg0, %c0_i32 : i32, i32
  }
  func.func @transform_3(%arg0: i32) -> (i32, i32, i32) {
    %c0_i32 = arith.constant 0 : i32
    %c0_i32_0 = arith.constant 0 : i32
    %c0_i32_1 = arith.constant 0 : i32
    return %arg0, %c0_i32, %c0_i32_0 : i32, i32, i32
  }
}

module attributes {stable_mosaic.version = 11 : i64} {
  func.func @_gru_kernel(%arg0: i32, %arg1: memref<2x2x32xbf16, #tpu.memory_space<vmem>>, %arg2: memref<32x48xbf16, #tpu.memory_space<vmem>>, %arg3: memref<16x48xf32, #tpu.memory_space<vmem>>, %arg4: memref<1x48xf32, #tpu.memory_space<vmem>>, %arg5: memref<1x48xf32, #tpu.memory_space<vmem>>, %arg6: memref<2x2x16xf32, #tpu.memory_space<vmem>>, %arg7: memref<2x16xf32, #tpu.memory_space<vmem>>, %arg8: memref<2x2x48xf32, #tpu.memory_space<vmem>>, %arg9: memref<2x16xf32, #tpu.memory_space<vmem>>) attributes {dimension_semantics = [#tpu.dimension_semantics<parallel>], iteration_bounds = array<i64: 1>, scalar_prefetch = 0 : i64, scratch_operands = 2 : i64, tpu.core_type = #tpu.core_type<tc>, window_params = [{transform_indices = @transform_0, window_bounds = array<i64: 2, 2, 32>}, {pipeline_mode = #tpu.pipeline_mode<synchronous>, transform_indices = @transform_1, window_bounds = array<i64: 32, 48>}, {pipeline_mode = #tpu.pipeline_mode<synchronous>, transform_indices = @transform_2, window_bounds = array<i64: 16, 48>}, {pipeline_mode = #tpu.pipeline_mode<synchronous>, transform_indices = @transform_3, window_bounds = array<i64: 1, 48>}, {pipeline_mode = #tpu.pipeline_mode<synchronous>, transform_indices = @transform_4, window_bounds = array<i64: 1, 48>}, {transform_indices = @transform_5, window_bounds = array<i64: 2, 2, 16>}, {transform_indices = @transform_6, window_bounds = array<i64: 2, 16>}]} {
    %c0 = arith.constant 0 : index
    %c0_0 = arith.constant 0 : index
    %c0_1 = arith.constant 0 : index
    %0 = vector.load %arg1[%c0, %c0_0, %c0_1] : memref<2x2x32xbf16, #tpu.memory_space<vmem>>, vector<2x2x32xbf16>
    %1 = vector.shape_cast %0 : vector<2x2x32xbf16> to vector<4x32xbf16>
    %c0_2 = arith.constant 0 : index
    %c0_3 = arith.constant 0 : index
    %2 = vector.load %arg2[%c0_2, %c0_3] : memref<32x48xbf16, #tpu.memory_space<vmem>>, vector<32x48xbf16>
    %cst = arith.constant dense<0.000000e+00> : vector<4x48xf32>
    %3 = tpu.matmul %1, %2, %cst {dimension_numbers = #tpu.dot_dimension_numbers<[1], [0], [0], [1], [0, 0, 1, 1], [], []>} : vector<4x32xbf16>, vector<32x48xbf16>, vector<4x48xf32> -> vector<4x48xf32>
    %4 = vector.shape_cast %3 : vector<4x48xf32> to vector<2x2x48xf32>
    %c0_4 = arith.constant 0 : index
    %c0_5 = arith.constant 0 : index
    %5 = vector.load %arg4[%c0_4, %c0_5] : memref<1x48xf32, #tpu.memory_space<vmem>>, vector<1x48xf32>
    %6 = vector.shape_cast %5 : vector<1x48xf32> to vector<1x1x48xf32>
    %7 = vector.broadcast %6 : vector<1x1x48xf32> to vector<2x2x48xf32>
    %8 = arith.addf %4, %7 : vector<2x2x48xf32>
    %c0_6 = arith.constant 0 : index
    %c0_7 = arith.constant 0 : index
    %c0_8 = arith.constant 0 : index
    %9 = vector.load %arg8[%c0_6, %c0_7, %c0_8] : memref<2x2x48xf32, #tpu.memory_space<vmem>>, vector<2x2x48xf32>
    tpu.vector_store %arg8[%c0_6, %c0_7, %c0_8], %8 {strides = array<i32>} : memref<2x2x48xf32, #tpu.memory_space<vmem>>, vector<2x2x48xf32>,
    %cst_9 = arith.constant 0.000000e+00 : f32
    %10 = vector.broadcast %cst_9 : f32 to vector<2x16xf32>
    %c0_10 = arith.constant 0 : index
    %c0_11 = arith.constant 0 : index
    %11 = vector.load %arg9[%c0_10, %c0_11] : memref<2x16xf32, #tpu.memory_space<vmem>>, vector<2x16xf32>
    tpu.vector_store %arg9[%c0_10, %c0_11], %10 {strides = array<i32>} : memref<2x16xf32, #tpu.memory_space<vmem>>, vector<2x16xf32>,
    %c0_i32 = arith.constant 0 : i32
    %c0_12 = arith.constant 0 : index
    %c0_13 = arith.constant 0 : index
    %12 = vector.load %arg9[%c0_12, %c0_13] : memref<2x16xf32, #tpu.memory_space<vmem>>, vector<2x16xf32>
    %13 = arith.index_cast %c0_i32 : i32 to index
    %c0_14 = arith.constant 0 : index
    %c0_15 = arith.constant 0 : index
    %14 = vector.load %arg8[%13, %c0_14, %c0_15] : memref<2x2x48xf32, #tpu.memory_space<vmem>>, vector<1x2x48xf32>
    %15 = vector.shape_cast %14 : vector<1x2x48xf32> to vector<2x48xf32>
    %c0_16 = arith.constant 0 : index
    %c0_17 = arith.constant 0 : index
    %16 = vector.load %arg3[%c0_16, %c0_17] : memref<16x48xf32, #tpu.memory_space<vmem>>, vector<16x48xf32>
    %cst_18 = arith.constant dense<0.000000e+00> : vector<2x48xf32>
    %17 = tpu.matmul %12, %16, %cst_18 {dimension_numbers = #tpu.dot_dimension_numbers<[1], [0], [0], [1], [0, 0, 1, 1], [], []>} : vector<2x16xf32>, vector<16x48xf32>, vector<2x48xf32> -> vector<2x48xf32>
    %c0_19 = arith.constant 0 : index
    %c0_20 = arith.constant 0 : index
    %18 = vector.load %arg5[%c0_19, %c0_20] : memref<1x48xf32, #tpu.memory_space<vmem>>, vector<1x48xf32>
    %19 = vector.broadcast %18 : vector<1x48xf32> to vector<2x48xf32>
    %20 = arith.addf %17, %19 : vector<2x48xf32>
    %21 = vector.extract_strided_slice %15 {offsets = [0, 0], sizes = [2, 16], strides = [1, 1]} : vector<2x48xf32> to vector<2x16xf32>
    %22 = vector.extract_strided_slice %20 {offsets = [0, 0], sizes = [2, 16], strides = [1, 1]} : vector<2x48xf32> to vector<2x16xf32>
    %23 = arith.addf %21, %22 : vector<2x16xf32>
    %24 = arith.negf %23 : vector<2x16xf32>
    %25 = math.exp %24 : vector<2x16xf32>
    %cst_21 = arith.constant 1.000000e+00 : f32
    %26 = vector.broadcast %cst_21 : f32 to vector<2x16xf32>
    %27 = arith.addf %26, %25 : vector<2x16xf32>
    %28 = arith.divf %26, %27 : vector<2x16xf32>
    %29 = vector.extract_strided_slice %15 {offsets = [0, 16], sizes = [2, 16], strides = [1, 1]} : vector<2x48xf32> to vector<2x16xf32>
    %30 = vector.extract_strided_slice %20 {offsets = [0, 16], sizes = [2, 16], strides = [1, 1]} : vector<2x48xf32> to vector<2x16xf32>
    %31 = arith.addf %29, %30 : vector<2x16xf32>
    %32 = arith.negf %31 : vector<2x16xf32>
    %33 = math.exp %32 : vector<2x16xf32>
    %cst_22 = arith.constant 1.000000e+00 : f32
    %34 = vector.broadcast %cst_22 : f32 to vector<2x16xf32>
    %35 = arith.addf %34, %33 : vector<2x16xf32>
    %36 = arith.divf %34, %35 : vector<2x16xf32>
    %37 = vector.extract_strided_slice %15 {offsets = [0, 32], sizes = [2, 16], strides = [1, 1]} : vector<2x48xf32> to vector<2x16xf32>
    %38 = vector.extract_strided_slice %20 {offsets = [0, 32], sizes = [2, 16], strides = [1, 1]} : vector<2x48xf32> to vector<2x16xf32>
    %39 = arith.mulf %28, %38 : vector<2x16xf32>
    %40 = arith.addf %37, %39 : vector<2x16xf32>
    %41 = math.tanh %40 : vector<2x16xf32>
    %cst_23 = arith.constant 1.000000e+00 : f32
    %42 = vector.broadcast %cst_23 : f32 to vector<2x16xf32>
    %43 = arith.subf %42, %36 : vector<2x16xf32>
    %44 = arith.mulf %43, %41 : vector<2x16xf32>
    %45 = arith.mulf %36, %12 : vector<2x16xf32>
    %46 = arith.addf %44, %45 : vector<2x16xf32>
    %c0_24 = arith.constant 0 : index
    %c0_25 = arith.constant 0 : index
    %47 = vector.load %arg9[%c0_24, %c0_25] : memref<2x16xf32, #tpu.memory_space<vmem>>, vector<2x16xf32>
    tpu.vector_store %arg9[%c0_24, %c0_25], %46 {strides = array<i32>} : memref<2x16xf32, #tpu.memory_space<vmem>>, vector<2x16xf32>,
    %48 = arith.index_cast %c0_i32 : i32 to index
    %c0_26 = arith.constant 0 : index
    %c0_27 = arith.constant 0 : index
    %49 = vector.load %arg6[%48, %c0_26, %c0_27] : memref<2x2x16xf32, #tpu.memory_space<vmem>>, vector<1x2x16xf32>
    %50 = vector.shape_cast %49 : vector<1x2x16xf32> to vector<2x16xf32>
    %51 = vector.shape_cast %46 : vector<2x16xf32> to vector<1x2x16xf32>
    tpu.vector_store %arg6[%48, %c0_26, %c0_27], %51 {strides = array<i32>} : memref<2x2x16xf32, #tpu.memory_space<vmem>>, vector<1x2x16xf32>,
    %c1_i32 = arith.constant 1 : i32
    %c0_28 = arith.constant 0 : index
    %c0_29 = arith.constant 0 : index
    %52 = vector.load %arg9[%c0_28, %c0_29] : memref<2x16xf32, #tpu.memory_space<vmem>>, vector<2x16xf32>
    %53 = arith.index_cast %c1_i32 : i32 to index
    %c0_30 = arith.constant 0 : index
    %c0_31 = arith.constant 0 : index
    %54 = vector.load %arg8[%53, %c0_30, %c0_31] : memref<2x2x48xf32, #tpu.memory_space<vmem>>, vector<1x2x48xf32>
    %55 = vector.shape_cast %54 : vector<1x2x48xf32> to vector<2x48xf32>
    %c0_32 = arith.constant 0 : index
    %c0_33 = arith.constant 0 : index
    %56 = vector.load %arg3[%c0_32, %c0_33] : memref<16x48xf32, #tpu.memory_space<vmem>>, vector<16x48xf32>
    %cst_34 = arith.constant dense<0.000000e+00> : vector<2x48xf32>
    %57 = tpu.matmul %52, %56, %cst_34 {dimension_numbers = #tpu.dot_dimension_numbers<[1], [0], [0], [1], [0, 0, 1, 1], [], []>} : vector<2x16xf32>, vector<16x48xf32>, vector<2x48xf32> -> vector<2x48xf32>
    %c0_35 = arith.constant 0 : index
    %c0_36 = arith.constant 0 : index
    %58 = vector.load %arg5[%c0_35, %c0_36] : memref<1x48xf32, #tpu.memory_space<vmem>>, vector<1x48xf32>
    %59 = vector.broadcast %58 : vector<1x48xf32> to vector<2x48xf32>
    %60 = arith.addf %57, %59 : vector<2x48xf32>
    %61 = vector.extract_strided_slice %55 {offsets = [0, 0], sizes = [2, 16], strides = [1, 1]} : vector<2x48xf32> to vector<2x16xf32>
    %62 = vector.extract_strided_slice %60 {offsets = [0, 0], sizes = [2, 16], strides = [1, 1]} : vector<2x48xf32> to vector<2x16xf32>
    %63 = arith.addf %61, %62 : vector<2x16xf32>
    %64 = arith.negf %63 : vector<2x16xf32>
    %65 = math.exp %64 : vector<2x16xf32>
    %cst_37 = arith.constant 1.000000e+00 : f32
    %66 = vector.broadcast %cst_37 : f32 to vector<2x16xf32>
    %67 = arith.addf %66, %65 : vector<2x16xf32>
    %68 = arith.divf %66, %67 : vector<2x16xf32>
    %69 = vector.extract_strided_slice %55 {offsets = [0, 16], sizes = [2, 16], strides = [1, 1]} : vector<2x48xf32> to vector<2x16xf32>
    %70 = vector.extract_strided_slice %60 {offsets = [0, 16], sizes = [2, 16], strides = [1, 1]} : vector<2x48xf32> to vector<2x16xf32>
    %71 = arith.addf %69, %70 : vector<2x16xf32>
    %72 = arith.negf %71 : vector<2x16xf32>
    %73 = math.exp %72 : vector<2x16xf32>
    %cst_38 = arith.constant 1.000000e+00 : f32
    %74 = vector.broadcast %cst_38 : f32 to vector<2x16xf32>
    %75 = arith.addf %74, %73 : vector<2x16xf32>
    %76 = arith.divf %74, %75 : vector<2x16xf32>
    %77 = vector.extract_strided_slice %55 {offsets = [0, 32], sizes = [2, 16], strides = [1, 1]} : vector<2x48xf32> to vector<2x16xf32>
    %78 = vector.extract_strided_slice %60 {offsets = [0, 32], sizes = [2, 16], strides = [1, 1]} : vector<2x48xf32> to vector<2x16xf32>
    %79 = arith.mulf %68, %78 : vector<2x16xf32>
    %80 = arith.addf %77, %79 : vector<2x16xf32>
    %81 = math.tanh %80 : vector<2x16xf32>
    %cst_39 = arith.constant 1.000000e+00 : f32
    %82 = vector.broadcast %cst_39 : f32 to vector<2x16xf32>
    %83 = arith.subf %82, %76 : vector<2x16xf32>
    %84 = arith.mulf %83, %81 : vector<2x16xf32>
    %85 = arith.mulf %76, %52 : vector<2x16xf32>
    %86 = arith.addf %84, %85 : vector<2x16xf32>
    %c0_40 = arith.constant 0 : index
    %c0_41 = arith.constant 0 : index
    %87 = vector.load %arg9[%c0_40, %c0_41] : memref<2x16xf32, #tpu.memory_space<vmem>>, vector<2x16xf32>
    tpu.vector_store %arg9[%c0_40, %c0_41], %86 {strides = array<i32>} : memref<2x16xf32, #tpu.memory_space<vmem>>, vector<2x16xf32>,
    %88 = arith.index_cast %c1_i32 : i32 to index
    %c0_42 = arith.constant 0 : index
    %c0_43 = arith.constant 0 : index
    %89 = vector.load %arg6[%88, %c0_42, %c0_43] : memref<2x2x16xf32, #tpu.memory_space<vmem>>, vector<1x2x16xf32>
    %90 = vector.shape_cast %89 : vector<1x2x16xf32> to vector<2x16xf32>
    %91 = vector.shape_cast %86 : vector<2x16xf32> to vector<1x2x16xf32>
    tpu.vector_store %arg6[%88, %c0_42, %c0_43], %91 {strides = array<i32>} : memref<2x2x16xf32, #tpu.memory_space<vmem>>, vector<1x2x16xf32>,
    %c2_i32 = arith.constant 2 : i32
    %c0_44 = arith.constant 0 : index
    %c0_45 = arith.constant 0 : index
    %92 = vector.load %arg9[%c0_44, %c0_45] : memref<2x16xf32, #tpu.memory_space<vmem>>, vector<2x16xf32>
    %c0_46 = arith.constant 0 : index
    %c0_47 = arith.constant 0 : index
    %93 = vector.load %arg7[%c0_46, %c0_47] : memref<2x16xf32, #tpu.memory_space<vmem>>, vector<2x16xf32>
    tpu.vector_store %arg7[%c0_46, %c0_47], %92 {strides = array<i32>} : memref<2x16xf32, #tpu.memory_space<vmem>>, vector<2x16xf32>,
    return
  }
  func.func @transform_0(%arg0: i32) -> (i32, i32, i32) {
    %c0_i32 = arith.constant 0 : i32
    %c0_i32_0 = arith.constant 0 : i32
    %c0_i32_1 = arith.constant 0 : i32
    return %c0_i32, %arg0, %c0_i32_0 : i32, i32, i32
  }
  func.func @transform_1(%arg0: i32) -> (i32, i32) {
    %c0_i32 = arith.constant 0 : i32
    %c0_i32_0 = arith.constant 0 : i32
    %c0_i32_1 = arith.constant 0 : i32
    return %c0_i32, %c0_i32_0 : i32, i32
  }
  func.func @transform_2(%arg0: i32) -> (i32, i32) {
    %c0_i32 = arith.constant 0 : i32
    %c0_i32_0 = arith.constant 0 : i32
    %c0_i32_1 = arith.constant 0 : i32
    return %c0_i32, %c0_i32_0 : i32, i32
  }
  func.func @transform_3(%arg0: i32) -> (i32, i32) {
    %c0_i32 = arith.constant 0 : i32
    %c0_i32_0 = arith.constant 0 : i32
    %c0_i32_1 = arith.constant 0 : i32
    return %c0_i32, %c0_i32_0 : i32, i32
  }
  func.func @transform_4(%arg0: i32) -> (i32, i32) {
    %c0_i32 = arith.constant 0 : i32
    %c0_i32_0 = arith.constant 0 : i32
    %c0_i32_1 = arith.constant 0 : i32
    return %c0_i32, %c0_i32_0 : i32, i32
  }
  func.func @transform_5(%arg0: i32) -> (i32, i32, i32) {
    %c0_i32 = arith.constant 0 : i32
    %c0_i32_0 = arith.constant 0 : i32
    %c0_i32_1 = arith.constant 0 : i32
    return %c0_i32, %arg0, %c0_i32_0 : i32, i32, i32
  }
  func.func @transform_6(%arg0: i32) -> (i32, i32) {
    %c0_i32 = arith.constant 0 : i32
    %c0_i32_0 = arith.constant 0 : i32
    return %arg0, %c0_i32 : i32, i32
  }
}

module attributes {stable_mosaic.version = 11 : i64} {
  func.func @_bn_relu_kernel(%arg0: i32, %arg1: memref<8x128xf32, #tpu.memory_space<vmem>>, %arg2: memref<1x128xf32, #tpu.memory_space<vmem>>, %arg3: memref<1x128xf32, #tpu.memory_space<vmem>>, %arg4: memref<8x128xf32, #tpu.memory_space<vmem>>) attributes {dimension_semantics = [#tpu.dimension_semantics<parallel>], iteration_bounds = array<i64: 1>, scalar_prefetch = 0 : i64, scratch_operands = 0 : i64, tpu.core_type = #tpu.core_type<tc>, window_params = [{transform_indices = @transform_0, window_bounds = array<i64: 8, 128>}, {pipeline_mode = #tpu.pipeline_mode<synchronous>, transform_indices = @transform_1, window_bounds = array<i64: 1, 128>}, {pipeline_mode = #tpu.pipeline_mode<synchronous>, transform_indices = @transform_2, window_bounds = array<i64: 1, 128>}, {transform_indices = @transform_3, window_bounds = array<i64: 8, 128>}]} {
    %c0 = arith.constant 0 : index
    %c0_0 = arith.constant 0 : index
    %0 = vector.load %arg1[%c0, %c0_0] : memref<8x128xf32, #tpu.memory_space<vmem>>, vector<8x128xf32>
    %c0_1 = arith.constant 0 : index
    %c0_2 = arith.constant 0 : index
    %1 = vector.load %arg2[%c0_1, %c0_2] : memref<1x128xf32, #tpu.memory_space<vmem>>, vector<1x128xf32>
    %2 = vector.broadcast %1 : vector<1x128xf32> to vector<8x128xf32>
    %3 = arith.mulf %0, %2 : vector<8x128xf32>
    %c0_3 = arith.constant 0 : index
    %c0_4 = arith.constant 0 : index
    %4 = vector.load %arg3[%c0_3, %c0_4] : memref<1x128xf32, #tpu.memory_space<vmem>>, vector<1x128xf32>
    %5 = vector.broadcast %4 : vector<1x128xf32> to vector<8x128xf32>
    %6 = arith.addf %3, %5 : vector<8x128xf32>
    %cst = arith.constant 0.000000e+00 : f32
    %7 = vector.broadcast %cst : f32 to vector<8x128xf32>
    %8 = arith.maximumf %6, %7 : vector<8x128xf32>
    %c0_5 = arith.constant 0 : index
    %c0_6 = arith.constant 0 : index
    %9 = vector.load %arg4[%c0_5, %c0_6] : memref<8x128xf32, #tpu.memory_space<vmem>>, vector<8x128xf32>
    tpu.vector_store %arg4[%c0_5, %c0_6], %8 {strides = array<i32>} : memref<8x128xf32, #tpu.memory_space<vmem>>, vector<8x128xf32>,
    return
  }
  func.func @transform_0(%arg0: i32) -> (i32, i32) {
    %c0_i32 = arith.constant 0 : i32
    %c0_i32_0 = arith.constant 0 : i32
    return %arg0, %c0_i32 : i32, i32
  }
  func.func @transform_1(%arg0: i32) -> (i32, i32) {
    %c0_i32 = arith.constant 0 : i32
    %c0_i32_0 = arith.constant 0 : i32
    %c0_i32_1 = arith.constant 0 : i32
    return %c0_i32, %c0_i32_0 : i32, i32
  }
  func.func @transform_2(%arg0: i32) -> (i32, i32) {
    %c0_i32 = arith.constant 0 : i32
    %c0_i32_0 = arith.constant 0 : i32
    %c0_i32_1 = arith.constant 0 : i32
    return %c0_i32, %c0_i32_0 : i32, i32
  }
  func.func @transform_3(%arg0: i32) -> (i32, i32) {
    %c0_i32 = arith.constant 0 : i32
    %c0_i32_0 = arith.constant 0 : i32
    return %arg0, %c0_i32 : i32, i32
  }
}

</mosaic_0001>

<llo_original>
// kernel: _lambda_.8
$region0: #{_lambda_.8}
  #allocation0 [shape = 'u32[]', space=smem, size = 0x4, offset = 0x4, fixed_abs, tag = 'smem constant byte address 0x4 - core index']
  #allocation1 [shape = 'u32[144,128]{1,0:T(1,128)}', space=vmem, size = 0x12000, scoped, tag = 'internal scratch']
  %s0 = inlined_call_operand.vmem [shape: f32[128,128], index: 0, kind: input, shape index: {}]
  %s1 = inlined_call_operand.vmem [shape: f32[1,128], index: 1, kind: input, shape index: {}]
  %s2 = inlined_call_operand.vmem [shape: f32[1,128], index: 2, kind: input, shape index: {}]
  %s3 = inlined_call_operand.vmem [shape: f32[128,128], index: 3, kind: output, shape index: {}]
  %s4 = sld [smem:[#allocation0]]
  $region22: #{_lambda_.8} parent=0
    _
  %s6 = ssub.s32 1, %s4
  %s7 = scalar_select 0, %s6, %s4
  // Predicated region
  $region2: #{_lambda_.8} parent=0 // pred_check
    _
  $region3: #{_lambda_.8} parent=0 // pred_check_branch
    %9 = sbr.rel (0) target = $region5
  $region4: #{_lambda_.8} parent=0 // pred_region
    _
  $region5: #{_lambda_.8} parent=0 // pred_fallthru
    _
  // Predicated region
  $region6: #{_lambda_.8} parent=0 // pred_check
    _
  $region7: #{_lambda_.8} parent=0 // pred_check_branch
    %11 = sbr.rel (0) target = $region9
  $region8: #{_lambda_.8} parent=0 // pred_region
    _
  $region9: #{_lambda_.8} parent=0 // pred_fallthru
    _
  // Predicated region
  $region10: #{_lambda_.8} parent=0 // pred_check
    _
  $region11: #{_lambda_.8} parent=0 // pred_check_branch
    %13 = sbr.rel (0) target = $region13
  $region12: #{_lambda_.8} parent=0 // pred_region
    _
  $region13: #{_lambda_.8} parent=0 // pred_fallthru
    _
  %v14 = vld [vmem:[%s0] sm:$0xff]
  %v15 = vld [vmem:[%s0 + $0x8] sm:$0xff]
  %v16 = vld [vmem:[%s0 + $0x10] sm:$0xff]
  %v17 = vld [vmem:[%s0 + $0x18] sm:$0xff]
  %v18 = vld [vmem:[%s0 + $0x20] sm:$0xff]
  %v19 = vld [vmem:[%s0 + $0x28] sm:$0xff]
  %v20 = vld [vmem:[%s0 + $0x30] sm:$0xff]
  %v21 = vld [vmem:[%s0 + $0x38] sm:$0xff]
  %v22 = vld [vmem:[%s0 + $0x40] sm:$0xff]
  %v23 = vld [vmem:[%s0 + $0x48] sm:$0xff]
  %v24 = vld [vmem:[%s0 + $0x50] sm:$0xff]
  %v25 = vld [vmem:[%s0 + $0x58] sm:$0xff]
  %v26 = vld [vmem:[%s0 + $0x60] sm:$0xff]
  %v27 = vld [vmem:[%s0 + $0x68] sm:$0xff]
  %v28 = vld [vmem:[%s0 + $0x70] sm:$0xff]
  %v29 = vld [vmem:[%s0 + $0x78] sm:$0xff]
  %v30 = vld [vmem:[%s1] sm:$0x1]
  %v32 = vlaneseq
  %v33 = vshrl.u32 %v32, 7
  %v34 = vsub.s32 0, %v33
  %v35 = vrot.slane %v30, %v34
  %v37 = vmul.f32 %v14, %v35
  %v38 = vmul.f32 %v15, %v35
  %v39 = vmul.f32 %v16, %v35
  %v40 = vmul.f32 %v17, %v35
  %v41 = vmul.f32 %v18, %v35
  %v42 = vmul.f32 %v19, %v35
  %v43 = vmul.f32 %v20, %v35
  %v44 = vmul.f32 %v21, %v35
  %v45 = vmul.f32 %v22, %v35
  %v46 = vmul.f32 %v23, %v35
  %v47 = vmul.f32 %v24, %v35
  %v48 = vmul.f32 %v25, %v35
  %v49 = vmul.f32 %v26, %v35
  %v50 = vmul.f32 %v27, %v35
  %v51 = vmul.f32 %v28, %v35
  %v52 = vmul.f32 %v29, %v35
  %v53 = vld [vmem:[%s2] sm:$0x1]
  %v55 = vlaneseq
  %v56 = vshrl.u32 %v55, 7
  %v57 = vsub.s32 0, %v56
  %v58 = vrot.slane %v53, %v57
  %v60 = vadd.f32 %v37, %v58
  %v61 = vadd.f32 %v38, %v58
  %v62 = vadd.f32 %v39, %v58
  %v63 = vadd.f32 %v40, %v58
  %v64 = vadd.f32 %v41, %v58
  %v65 = vadd.f32 %v42, %v58
  %v66 = vadd.f32 %v43, %v58
  %v67 = vadd.f32 %v44, %v58
  %v68 = vadd.f32 %v45, %v58
  %v69 = vadd.f32 %v46, %v58
  %v70 = vadd.f32 %v47, %v58
  %v71 = vadd.f32 %v48, %v58
  %v72 = vadd.f32 %v49, %v58
  %v73 = vadd.f32 %v50, %v58
  %v74 = vadd.f32 %v51, %v58
  %v75 = vadd.f32 %v52, %v58
  %v76 = vmax.f32 %v60, 0.0
  %v77 = vmax.f32 %v61, 0.0
  %v78 = vmax.f32 %v62, 0.0
  %v79 = vmax.f32 %v63, 0.0
  %v80 = vmax.f32 %v64, 0.0
  %v81 = vmax.f32 %v65, 0.0
  %v82 = vmax.f32 %v66, 0.0
  %v83 = vmax.f32 %v67, 0.0
  %v84 = vmax.f32 %v68, 0.0
  %v85 = vmax.f32 %v69, 0.0
  %v86 = vmax.f32 %v70, 0.0
  %v87 = vmax.f32 %v71, 0.0
  %v88 = vmax.f32 %v72, 0.0
  %v89 = vmax.f32 %v73, 0.0
  %v90 = vmax.f32 %v74, 0.0
  %v91 = vmax.f32 %v75, 0.0
  %92 = vst [vmem:[%s3] sm:$0xff] %v76
  %93 = vst [vmem:[%s3 + $0x8] sm:$0xff] %v77
  %94 = vst [vmem:[%s3 + $0x10] sm:$0xff] %v78
  %95 = vst [vmem:[%s3 + $0x18] sm:$0xff] %v79
  %96 = vst [vmem:[%s3 + $0x20] sm:$0xff] %v80
  %97 = vst [vmem:[%s3 + $0x28] sm:$0xff] %v81
  %98 = vst [vmem:[%s3 + $0x30] sm:$0xff] %v82
  %99 = vst [vmem:[%s3 + $0x38] sm:$0xff] %v83
  %100 = vst [vmem:[%s3 + $0x40] sm:$0xff] %v84
  %101 = vst [vmem:[%s3 + $0x48] sm:$0xff] %v85
  %102 = vst [vmem:[%s3 + $0x50] sm:$0xff] %v86
  %103 = vst [vmem:[%s3 + $0x58] sm:$0xff] %v87
  %104 = vst [vmem:[%s3 + $0x60] sm:$0xff] %v88
  %105 = vst [vmem:[%s3 + $0x68] sm:$0xff] %v89
  %106 = vst [vmem:[%s3 + $0x70] sm:$0xff] %v90
  %107 = vst [vmem:[%s3 + $0x78] sm:$0xff] %v91
  // Predicated region
  $region14: #{_lambda_.8} parent=0 // pred_check
    _
  $region15: #{_lambda_.8} parent=0 // pred_check_branch
    %109 = sbr.rel (0) target = $region17
  $region16: #{_lambda_.8} parent=0 // pred_region
    _
  $region17: #{_lambda_.8} parent=0 // pred_fallthru
    _
  // Predicated region
  $region18: #{_lambda_.8} parent=0 // pred_check
    _
  $region19: #{_lambda_.8} parent=0 // pred_check_branch
    %111 = sbr.rel (0) target = $region21
  $region20: #{_lambda_.8} parent=0 // pred_region
    _
  $region21: #{_lambda_.8} parent=0 // pred_fallthru
    _

// kernel: _lambda_.7
$region0: #{_lambda_.7}
  #allocation0 [shape = 'u32[]', space=smem, size = 0x4, offset = 0x4, fixed_abs, tag = 'smem constant byte address 0x4 - core index']
  #allocation1 [shape = 'u32[144,128]{1,0:T(1,128)}', space=vmem, size = 0x12000, scoped, tag = 'internal scratch']
  %s0 = inlined_call_operand.vmem [shape: bf16[128,36], index: 0, kind: input, shape index: {}]
  %s1 = inlined_call_operand.vmem [shape: bf16[36,128], index: 1, kind: input, shape index: {}]
  %s2 = inlined_call_operand.vmem [shape: f32[128,128], index: 2, kind: output, shape index: {0}]
  %s3 = inlined_call_operand.vmem [shape: f32[1,2,128], index: 3, kind: output, shape index: {1}]
  %4 = xla_tuple %s2, %s3
  %s5 = sld [smem:[#allocation0]]
  $region26: #{_lambda_.7} parent=0
    _
  %s7 = ssub.s32 1, %s5
  %s8 = scalar_select 0, %s7, %s5
  // Predicated region
  $region2: #{_lambda_.7} parent=0 // pred_check
    _
  $region3: #{_lambda_.7} parent=0 // pred_check_branch
    %10 = sbr.rel (0) target = $region5
  $region4: #{_lambda_.7} parent=0 // pred_region
    _
  $region5: #{_lambda_.7} parent=0 // pred_fallthru
    _
  // Predicated region
  $region6: #{_lambda_.7} parent=0 // pred_check
    _
  $region7: #{_lambda_.7} parent=0 // pred_check_branch
    %12 = sbr.rel (0) target = $region9
  $region8: #{_lambda_.7} parent=0 // pred_region
    _
  $region9: #{_lambda_.7} parent=0 // pred_fallthru
    _
  %v14 = vld [vmem:[%s0] sm:$0xf]
  %v15 = vld [vmem:[%s0 + $0x4] sm:$0xf]
  %v16 = vld [vmem:[%s0 + $0x8] sm:$0xf]
  %v17 = vld [vmem:[%s0 + $0xc] sm:$0xf]
  %v18 = vld [vmem:[%s0 + $0x10] sm:$0xf]
  %v19 = vld [vmem:[%s0 + $0x14] sm:$0xf]
  %v20 = vld [vmem:[%s0 + $0x18] sm:$0xf]
  %v21 = vld [vmem:[%s0 + $0x1c] sm:$0xf]
  %v22 = vld [vmem:[%s0 + $0x20] sm:$0xf]
  %v23 = vld [vmem:[%s0 + $0x24] sm:$0xf]
  %v24 = vld [vmem:[%s0 + $0x28] sm:$0xf]
  %v25 = vld [vmem:[%s0 + $0x2c] sm:$0xf]
  %v26 = vld [vmem:[%s0 + $0x30] sm:$0xf]
  %v27 = vld [vmem:[%s0 + $0x34] sm:$0xf]
  %v28 = vld [vmem:[%s0 + $0x38] sm:$0xf]
  %v29 = vld [vmem:[%s0 + $0x3c] sm:$0xf]
  %v30 = vld [vmem:[%s1] sm:$0xf]
  %v31 = vld [vmem:[%s1 + $0x4] sm:$0xf]
  %v32 = vld [vmem:[%s1 + $0x8] sm:$0xf]
  %v33 = vld [vmem:[%s1 + $0xc] sm:$0xf]
  %v34 = vld [vmem:[%s1 + $0x10] sm:$0x3]
  %v51 = vunpack.c.l.b16 %v14
  %v52 = vunpack.c.l.b16 %v15
  %v53 = vunpack.c.l.b16 %v16
  %v54 = vunpack.c.l.b16 %v17
  %v55 = vunpack.c.l.b16 %v18
  %v56 = vunpack.c.l.b16 %v19
  %v57 = vunpack.c.l.b16 %v20
  %v58 = vunpack.c.l.b16 %v21
  %v59 = vunpack.c.l.b16 %v22
  %v60 = vunpack.c.l.b16 %v23
  %v61 = vunpack.c.l.b16 %v24
  %v62 = vunpack.c.l.b16 %v25
  %v63 = vunpack.c.l.b16 %v26
  %v64 = vunpack.c.l.b16 %v27
  %v65 = vunpack.c.l.b16 %v28
  %v66 = vunpack.c.l.b16 %v29
  %v67 = vpack.c.b16 %v52, %v51
  %v68 = vpack.c.b16 %v54, %v53
  %v69 = vpack.c.b16 %v56, %v55
  %v70 = vpack.c.b16 %v58, %v57
  %v71 = vpack.c.b16 %v60, %v59
  %v72 = vpack.c.b16 %v62, %v61
  %v73 = vpack.c.b16 %v64, %v63
  %v74 = vpack.c.b16 %v66, %v65
  %v80 = vunpack.c.l.b16 %v30
  %v81 = vunpack.c.l.b16 %v31
  %v82 = vunpack.c.l.b16 %v32
  %v83 = vunpack.c.l.b16 %v33
  %v84 = vunpack.c.l.b16 %v34
  %v85 = vpack.c.b16 %v81, %v80
  %v86 = vpack.c.b16 %v83, %v82
  %v87 = vpack.c.b16 %v84, %v84
  %vm90 = vcmask 293888
  %v92 = vsel %vm90, %v67, 0
  %v95 = vsel %vm90, %v68, 0
  %v98 = vsel %vm90, %v69, 0
  %v101 = vsel %vm90, %v70, 0
  %v104 = vsel %vm90, %v71, 0
  %v107 = vsel %vm90, %v72, 0
  %v110 = vsel %vm90, %v73, 0
  %v113 = vsel %vm90, %v74, 0
  %vm115 = vcmask 1041408
  %v117 = vsel %vm115, %v87, 0
  %119 = vmatprep.subr.bf16.mxu0 0
  %120 = vmatpush1.bf16.msra.mxu0 %v85
  %121 = vmatprep.subr.bf16.mxu0 0
  %122 = vmatpush1.bf16.msra.mxu0 %v86
  %123 = vmatprep.subr.bf16.mxu0 0
  %124 = vmatpush1.bf16.msra.mxu0 %v117
  %125 = vmatprep.subr.bf16.mxu0 0
  %126 = vmatpush1.bf16.msra.mxu0 0
  %127 = vmatprep.subr.bf16.mxu0 0
  %128 = vmatpush1.bf16.msra.mxu0 0
  %129 = vmatprep.subr.bf16.mxu0 0
  %130 = vmatpush1.bf16.msra.mxu0 0
  %131 = vmatprep.subr.bf16.mxu0 0
  %132 = vmatpush1.bf16.msra.mxu0 0
  %133 = vmatprep.subr.bf16.mxu0 0
  %134 = vmatpush1.bf16.msra.mxu0 0
  %135 = vmatprep.subr.bf16.mxu0 0
  %136 = vmatpush1.bf16.msra.mxu0 0
  %137 = vmatprep.subr.bf16.mxu0 0
  %138 = vmatpush1.bf16.msra.mxu0 0
  %139 = vmatprep.subr.bf16.mxu0 0
  %140 = vmatpush1.bf16.msra.mxu0 0
  %141 = vmatprep.subr.bf16.mxu0 0
  %142 = vmatpush1.bf16.msra.mxu0 0
  %143 = vmatprep.subr.bf16.mxu0 0
  %144 = vmatpush1.bf16.msra.mxu0 0
  %145 = vmatprep.subr.bf16.mxu0 0
  %146 = vmatpush1.bf16.msra.mxu0 0
  %147 = vmatprep.subr.bf16.mxu0 0
  %148 = vmatpush1.bf16.msra.mxu0 0
  %149 = vmatprep.subr.bf16.mxu0 0
  %150 = vmatpush1.bf16.msra.mxu0 0
  %151 = vmatprep.mubr.bf16.mxu0 0
  %152 = vmatmul.mubr.bf16.gmra.mrb[0].mxu0 %v92
  %v153 = vpop.f32.mrb[0].mxu0
  %v154 = vadd.f32 0.0, %v153
  %v155 = vpop.f32.mrb[0].mxu0
  %v156 = vpop.f32.mrb[0].mxu0
  %v157 = vadd.f32 0.0, %v156
  %v158 = vpop.f32.mrb[0].mxu0
  %159 = vmatprep.mubr.bf16.mxu0 0
  %160 = vmatmul.mubr.bf16.gmra.mrb[0].mxu0 %v95
  %v161 = vpop.f32.mrb[0].mxu0
  %v162 = vadd.f32 0.0, %v161
  %v163 = vpop.f32.mrb[0].mxu0
  %v164 = vpop.f32.mrb[0].mxu0
  %v165 = vadd.f32 0.0, %v164
  %v166 = vpop.f32.mrb[0].mxu0
  %167 = vmatprep.mubr.bf16.mxu0 0
  %168 = vmatmul.mubr.bf16.gmra.mrb[0].mxu0 %v98
  %v169 = vpop.f32.mrb[0].mxu0
  %v170 = vadd.f32 0.0, %v169
  %v171 = vpop.f32.mrb[0].mxu0
  %v172 = vpop.f32.mrb[0].mxu0
  %v173 = vadd.f32 0.0, %v172
  %v174 = vpop.f32.mrb[0].mxu0
  %175 = vmatprep.mubr.bf16.mxu0 0
  %176 = vmatmul.mubr.bf16.gmra.mrb[0].mxu0 %v101
  %v177 = vpop.f32.mrb[0].mxu0
  %v178 = vadd.f32 0.0, %v177
  %v179 = vpop.f32.mrb[0].mxu0
  %v180 = vpop.f32.mrb[0].mxu0
  %v181 = vadd.f32 0.0, %v180
  %v182 = vpop.f32.mrb[0].mxu0
  %183 = vmatprep.mubr.bf16.mxu0 0
  %184 = vmatmul.mubr.bf16.gmra.mrb[0].mxu0 %v104
  %v185 = vpop.f32.mrb[0].mxu0
  %v186 = vadd.f32 0.0, %v185
  %v187 = vpop.f32.mrb[0].mxu0
  %v188 = vpop.f32.mrb[0].mxu0
  %v189 = vadd.f32 0.0, %v188
  %v190 = vpop.f32.mrb[0].mxu0
  %191 = vmatprep.mubr.bf16.mxu0 0
  %192 = vmatmul.mubr.bf16.gmra.mrb[0].mxu0 %v107
  %v193 = vpop.f32.mrb[0].mxu0
  %v194 = vadd.f32 0.0, %v193
  %v195 = vpop.f32.mrb[0].mxu0
  %v196 = vpop.f32.mrb[0].mxu0
  %v197 = vadd.f32 0.0, %v196
  %v198 = vpop.f32.mrb[0].mxu0
  %199 = vmatprep.mubr.bf16.mxu0 0
  %200 = vmatmul.mubr.bf16.gmra.mrb[0].mxu0 %v110
  %v201 = vpop.f32.mrb[0].mxu0
  %v202 = vadd.f32 0.0, %v201
  %v203 = vpop.f32.mrb[0].mxu0
  %v204 = vpop.f32.mrb[0].mxu0
  %v205 = vadd.f32 0.0, %v204
  %v206 = vpop.f32.mrb[0].mxu0
  %207 = vmatprep.mubr.bf16.mxu0 0
  %208 = vmatmul.mubr.bf16.gmra.mrb[0].mxu0 %v113
  %v209 = vpop.f32.mrb[0].mxu0
  %v210 = vadd.f32 0.0, %v209
  %v211 = vpop.f32.mrb[0].mxu0
  %v212 = vpop.f32.mrb[0].mxu0
  %v213 = vadd.f32 0.0, %v212
  %v214 = vpop.f32.mrb[0].mxu0
  %215 = vdwg.mxu0
  %216 = vst [vmem:[%s2] sm:$0xff] %v154
  %217 = vst [vmem:[%s2 + $0x8] sm:$0xff] %v157
  %218 = vst [vmem:[%s2 + $0x10] sm:$0xff] %v162
  %219 = vst [vmem:[%s2 + $0x18] sm:$0xff] %v165
  %220 = vst [vmem:[%s2 + $0x20] sm:$0xff] %v170
  %221 = vst [vmem:[%s2 + $0x28] sm:$0xff] %v173
  %222 = vst [vmem:[%s2 + $0x30] sm:$0xff] %v178
  %223 = vst [vmem:[%s2 + $0x38] sm:$0xff] %v181
  %224 = vst [vmem:[%s2 + $0x40] sm:$0xff] %v186
  %225 = vst [vmem:[%s2 + $0x48] sm:$0xff] %v189
  %226 = vst [vmem:[%s2 + $0x50] sm:$0xff] %v194
  %227 = vst [vmem:[%s2 + $0x58] sm:$0xff] %v197
  %228 = vst [vmem:[%s2 + $0x60] sm:$0xff] %v202
  %229 = vst [vmem:[%s2 + $0x68] sm:$0xff] %v205
  %230 = vst [vmem:[%s2 + $0x70] sm:$0xff] %v210
  %231 = vst [vmem:[%s2 + $0x78] sm:$0xff] %v213
  %v232 = vadd.f32 %v154, %v157
  %v233 = vadd.f32 %v232, %v162
  %v234 = vadd.f32 %v233, %v165
  %v235 = vadd.f32 %v234, %v170
  %v236 = vadd.f32 %v235, %v173
  %v237 = vadd.f32 %v236, %v178
  %v238 = vadd.f32 %v237, %v181
  %v239 = vadd.f32 %v238, %v186
  %v240 = vadd.f32 %v239, %v189
  %v241 = vadd.f32 %v240, %v194
  %v242 = vadd.f32 %v241, %v197
  %v243 = vadd.f32 %v242, %v202
  %v244 = vadd.f32 %v243, %v205
  %v245 = vadd.f32 %v244, %v210
  %v246 = vadd.f32 %v245, %v213
  %v247 = vrot.slane %v246, 4
  %v248 = vadd.f32 %v246, %v247
  %v249 = vrot.slane %v248, 2
  %v250 = vadd.f32 %v248, %v249
  %v251 = vrot.slane %v250, 1
  %v252 = vadd.f32 %v250, %v251
  %v253 = vmul.f32 %v154, %v154
  %v254 = vmul.f32 %v157, %v157
  %v255 = vmul.f32 %v162, %v162
  %v256 = vmul.f32 %v165, %v165
  %v257 = vmul.f32 %v170, %v170
  %v258 = vmul.f32 %v173, %v173
  %v259 = vmul.f32 %v178, %v178
  %v260 = vmul.f32 %v181, %v181
  %v261 = vmul.f32 %v186, %v186
  %v262 = vmul.f32 %v189, %v189
  %v263 = vmul.f32 %v194, %v194
  %v264 = vmul.f32 %v197, %v197
  %v265 = vmul.f32 %v202, %v202
  %v266 = vmul.f32 %v205, %v205
  %v267 = vmul.f32 %v210, %v210
  %v268 = vmul.f32 %v213, %v213
  %v269 = vadd.f32 %v253, %v254
  %v270 = vadd.f32 %v269, %v255
  %v271 = vadd.f32 %v270, %v256
  %v272 = vadd.f32 %v271, %v257
  %v273 = vadd.f32 %v272, %v258
  %v274 = vadd.f32 %v273, %v259
  %v275 = vadd.f32 %v274, %v260
  %v276 = vadd.f32 %v275, %v261
  %v277 = vadd.f32 %v276, %v262
  %v278 = vadd.f32 %v277, %v263
  %v279 = vadd.f32 %v278, %v264
  %v280 = vadd.f32 %v279, %v265
  %v281 = vadd.f32 %v280, %v266
  %v282 = vadd.f32 %v281, %v267
  %v283 = vadd.f32 %v282, %v268
  %v284 = vrot.slane %v283, 4
  %v285 = vadd.f32 %v283, %v284
  %v286 = vrot.slane %v285, 2
  %v287 = vadd.f32 %v285, %v286
  %v288 = vrot.slane %v287, 1
  %v289 = vadd.f32 %v287, %v288
  %vm290 = vcmask 1040384
  %v291 = vsel %vm290, %v252, %v289
  %292 = vst [vmem:[%s3] sm:$0x3] %v291
  // Predicated region
  $region10: #{_lambda_.7} parent=0 // pred_check
    _
  $region11: #{_lambda_.7} parent=0 // pred_check_branch
    %294 = sbr.rel (0) target = $region13
  $region12: #{_lambda_.7} parent=0 // pred_region
    _
  $region13: #{_lambda_.7} parent=0 // pred_fallthru
    _
  // Predicated region
  $region14: #{_lambda_.7} parent=0 // pred_check
    _
  $region15: #{_lambda_.7} parent=0 // pred_check_branch
    %296 = sbr.rel (0) target = $region17
  $region16: #{_lambda_.7} parent=0 // pred_region
    _
  $region17: #{_lambda_.7} parent=0 // pred_fallthru
    _
  // Predicated region
  $region18: #{_lambda_.7} parent=0 // pred_check
    _
  $region19: #{_lambda_.7} parent=0 // pred_check_branch
    %298 = sbr.rel (0) target = $region21
  $region20: #{_lambda_.7} parent=0 // pred_region
    _
  $region21: #{_lambda_.7} parent=0 // pred_fallthru
    _
  // Predicated region
  $region22: #{_lambda_.7} parent=0 // pred_check
    _
  $region23: #{_lambda_.7} parent=0 // pred_check_branch
    %300 = sbr.rel (0) target = $region25
  $region24: #{_lambda_.7} parent=0 // pred_region
    _
  $region25: #{_lambda_.7} parent=0 // pred_fallthru
    _

// kernel: _lambda_.9
$region0: #{_lambda_.9}
  #allocation0 [shape = 'u32[]', space=smem, size = 0x4, offset = 0x4, fixed_abs, tag = 'smem constant byte address 0x4 - core index']
  #allocation1 [shape = 'u32[144,128]{1,0:T(1,128)}', space=vmem, size = 0x12000, scoped, tag = 'internal scratch']
  %s0 = inlined_call_operand.vmem [shape: bf16[32,36], index: 0, kind: input, shape index: {}]
  %s1 = inlined_call_operand.vmem [shape: bf16[36,128], index: 1, kind: input, shape index: {}]
  %s2 = inlined_call_operand.vmem [shape: f32[32,128], index: 2, kind: output, shape index: {0}]
  %s3 = inlined_call_operand.vmem [shape: f32[1,2,128], index: 3, kind: output, shape index: {1}]
  %4 = xla_tuple %s2, %s3
  %s5 = sld [smem:[#allocation0]]
  $region26: #{_lambda_.9} parent=0
    _
  %s7 = ssub.s32 1, %s5
  %s8 = scalar_select 0, %s7, %s5
  // Predicated region
  $region2: #{_lambda_.9} parent=0 // pred_check
    _
  $region3: #{_lambda_.9} parent=0 // pred_check_branch
    %10 = sbr.rel (0) target = $region5
  $region4: #{_lambda_.9} parent=0 // pred_region
    _
  $region5: #{_lambda_.9} parent=0 // pred_fallthru
    _
  // Predicated region
  $region6: #{_lambda_.9} parent=0 // pred_check
    _
  $region7: #{_lambda_.9} parent=0 // pred_check_branch
    %12 = sbr.rel (0) target = $region9
  $region8: #{_lambda_.9} parent=0 // pred_region
    _
  $region9: #{_lambda_.9} parent=0 // pred_fallthru
    _
  %v14 = vld [vmem:[%s0] sm:$0xf]
  %v15 = vld [vmem:[%s0 + $0x4] sm:$0xf]
  %v16 = vld [vmem:[%s0 + $0x8] sm:$0xf]
  %v17 = vld [vmem:[%s0 + $0xc] sm:$0xf]
  %v18 = vld [vmem:[%s1] sm:$0xf]
  %v19 = vld [vmem:[%s1 + $0x4] sm:$0xf]
  %v20 = vld [vmem:[%s1 + $0x8] sm:$0xf]
  %v21 = vld [vmem:[%s1 + $0xc] sm:$0xf]
  %v22 = vld [vmem:[%s1 + $0x10] sm:$0x3]
  %v27 = vunpack.c.l.b16 %v14
  %v28 = vunpack.c.l.b16 %v15
  %v29 = vunpack.c.l.b16 %v16
  %v30 = vunpack.c.l.b16 %v17
  %v31 = vpack.c.b16 %v28, %v27
  %v32 = vpack.c.b16 %v30, %v29
  %v38 = vunpack.c.l.b16 %v18
  %v39 = vunpack.c.l.b16 %v19
  %v40 = vunpack.c.l.b16 %v20
  %v41 = vunpack.c.l.b16 %v21
  %v42 = vunpack.c.l.b16 %v22
  %v43 = vpack.c.b16 %v39, %v38
  %v44 = vpack.c.b16 %v41, %v40
  %v45 = vpack.c.b16 %v42, %v42
  %vm48 = vcmask 293888
  %v50 = vsel %vm48, %v31, 0
  %v53 = vsel %vm48, %v32, 0
  %vm55 = vcmask 1041408
  %v57 = vsel %vm55, %v45, 0
  %59 = vmatprep.subr.bf16.mxu0 0
  %60 = vmatpush1.bf16.msra.mxu0 %v43
  %61 = vmatprep.subr.bf16.mxu0 0
  %62 = vmatpush1.bf16.msra.mxu0 %v44
  %63 = vmatprep.subr.bf16.mxu0 0
  %64 = vmatpush1.bf16.msra.mxu0 %v57
  %65 = vmatprep.subr.bf16.mxu0 0
  %66 = vmatpush1.bf16.msra.mxu0 0
  %67 = vmatprep.subr.bf16.mxu0 0
  %68 = vmatpush1.bf16.msra.mxu0 0
  %69 = vmatprep.subr.bf16.mxu0 0
  %70 = vmatpush1.bf16.msra.mxu0 0
  %71 = vmatprep.subr.bf16.mxu0 0
  %72 = vmatpush1.bf16.msra.mxu0 0
  %73 = vmatprep.subr.bf16.mxu0 0
  %74 = vmatpush1.bf16.msra.mxu0 0
  %75 = vmatprep.subr.bf16.mxu0 0
  %76 = vmatpush1.bf16.msra.mxu0 0
  %77 = vmatprep.subr.bf16.mxu0 0
  %78 = vmatpush1.bf16.msra.mxu0 0
  %79 = vmatprep.subr.bf16.mxu0 0
  %80 = vmatpush1.bf16.msra.mxu0 0
  %81 = vmatprep.subr.bf16.mxu0 0
  %82 = vmatpush1.bf16.msra.mxu0 0
  %83 = vmatprep.subr.bf16.mxu0 0
  %84 = vmatpush1.bf16.msra.mxu0 0
  %85 = vmatprep.subr.bf16.mxu0 0
  %86 = vmatpush1.bf16.msra.mxu0 0
  %87 = vmatprep.subr.bf16.mxu0 0
  %88 = vmatpush1.bf16.msra.mxu0 0
  %89 = vmatprep.subr.bf16.mxu0 0
  %90 = vmatpush1.bf16.msra.mxu0 0
  %91 = vmatprep.mubr.bf16.mxu0 0
  %92 = vmatmul.mubr.bf16.gmra.mrb[0].mxu0 %v50
  %v93 = vpop.f32.mrb[0].mxu0
  %v94 = vadd.f32 0.0, %v93
  %v95 = vpop.f32.mrb[0].mxu0
  %v96 = vpop.f32.mrb[0].mxu0
  %v97 = vadd.f32 0.0, %v96
  %v98 = vpop.f32.mrb[0].mxu0
  %99 = vmatprep.mubr.bf16.mxu0 0
  %100 = vmatmul.mubr.bf16.gmra.mrb[0].mxu0 %v53
  %v101 = vpop.f32.mrb[0].mxu0
  %v102 = vadd.f32 0.0, %v101
  %v103 = vpop.f32.mrb[0].mxu0
  %v104 = vpop.f32.mrb[0].mxu0
  %v105 = vadd.f32 0.0, %v104
  %v106 = vpop.f32.mrb[0].mxu0
  %107 = vdwg.mxu0
  %108 = vst [vmem:[%s2] sm:$0xff] %v94
  %109 = vst [vmem:[%s2 + $0x8] sm:$0xff] %v97
  %110 = vst [vmem:[%s2 + $0x10] sm:$0xff] %v102
  %111 = vst [vmem:[%s2 + $0x18] sm:$0xff] %v105
  %v112 = vadd.f32 %v94, %v97
  %v113 = vadd.f32 %v112, %v102
  %v114 = vadd.f32 %v113, %v105
  %v115 = vrot.slane %v114, 4
  %v116 = vadd.f32 %v114, %v115
  %v117 = vrot.slane %v116, 2
  %v118 = vadd.f32 %v116, %v117
  %v119 = vrot.slane %v118, 1
  %v120 = vadd.f32 %v118, %v119
  %v121 = vmul.f32 %v94, %v94
  %v122 = vmul.f32 %v97, %v97
  %v123 = vmul.f32 %v102, %v102
  %v124 = vmul.f32 %v105, %v105
  %v125 = vadd.f32 %v121, %v122
  %v126 = vadd.f32 %v125, %v123
  %v127 = vadd.f32 %v126, %v124
  %v128 = vrot.slane %v127, 4
  %v129 = vadd.f32 %v127, %v128
  %v130 = vrot.slane %v129, 2
  %v131 = vadd.f32 %v129, %v130
  %v132 = vrot.slane %v131, 1
  %v133 = vadd.f32 %v131, %v132
  %vm134 = vcmask 1040384
  %v135 = vsel %vm134, %v120, %v133
  %136 = vst [vmem:[%s3] sm:$0x3] %v135
  // Predicated region
  $region10: #{_lambda_.9} parent=0 // pred_check
    _
  $region11: #{_lambda_.9} parent=0 // pred_check_branch
    %138 = sbr.rel (0) target = $region13
  $region12: #{_lambda_.9} parent=0 // pred_region
    _
  $region13: #{_lambda_.9} parent=0 // pred_fallthru
    _
  // Predicated region
  $region14: #{_lambda_.9} parent=0 // pred_check
    _
  $region15: #{_lambda_.9} parent=0 // pred_check_branch
    %140 = sbr.rel (0) target = $region17
  $region16: #{_lambda_.9} parent=0 // pred_region
    _
  $region17: #{_lambda_.9} parent=0 // pred_fallthru
    _
  // Predicated region
  $region18: #{_lambda_.9} parent=0 // pred_check
    _
  $region19: #{_lambda_.9} parent=0 // pred_check_branch
    %142 = sbr.rel (0) target = $region21
  $region20: #{_lambda_.9} parent=0 // pred_region
    _
  $region21: #{_lambda_.9} parent=0 // pred_fallthru
    _
  // Predicated region
  $region22: #{_lambda_.9} parent=0 // pred_check
    _
  $region23: #{_lambda_.9} parent=0 // pred_check_branch
    %144 = sbr.rel (0) target = $region25
  $region24: #{_lambda_.9} parent=0 // pred_region
    _
  $region25: #{_lambda_.9} parent=0 // pred_fallthru
    _

// kernel: _lambda_.10
$region0: #{_lambda_.10}
  #allocation0 [shape = 'u32[]', space=smem, size = 0x4, offset = 0x4, fixed_abs, tag = 'smem constant byte address 0x4 - core index']
  #allocation1 [shape = 'u32[144,128]{1,0:T(1,128)}', space=vmem, size = 0x12000, scoped, tag = 'internal scratch']
  %s0 = inlined_call_operand.vmem [shape: f32[32,128], index: 0, kind: input, shape index: {}]
  %s1 = inlined_call_operand.vmem [shape: f32[1,128], index: 1, kind: input, shape index: {}]
  %s2 = inlined_call_operand.vmem [shape: f32[1,128], index: 2, kind: input, shape index: {}]
  %s3 = inlined_call_operand.vmem [shape: f32[32,128], index: 3, kind: output, shape index: {}]
  %s4 = sld [smem:[#allocation0]]
  $region22: #{_lambda_.10} parent=0
    _
  %s6 = ssub.s32 1, %s4
  %s7 = scalar_select 0, %s6, %s4
  // Predicated region
  $region2: #{_lambda_.10} parent=0 // pred_check
    _
  $region3: #{_lambda_.10} parent=0 // pred_check_branch
    %9 = sbr.rel (0) target = $region5
  $region4: #{_lambda_.10} parent=0 // pred_region
    _
  $region5: #{_lambda_.10} parent=0 // pred_fallthru
    _
  // Predicated region
  $region6: #{_lambda_.10} parent=0 // pred_check
    _
  $region7: #{_lambda_.10} parent=0 // pred_check_branch
    %11 = sbr.rel (0) target = $region9
  $region8: #{_lambda_.10} parent=0 // pred_region
    _
  $region9: #{_lambda_.10} parent=0 // pred_fallthru
    _
  // Predicated region
  $region10: #{_lambda_.10} parent=0 // pred_check
    _
  $region11: #{_lambda_.10} parent=0 // pred_check_branch
    %13 = sbr.rel (0) target = $region13
  $region12: #{_lambda_.10} parent=0 // pred_region
    _
  $region13: #{_lambda_.10} parent=0 // pred_fallthru
    _
  %v14 = vld [vmem:[%s0] sm:$0xff]
  %v15 = vld [vmem:[%s0 + $0x8] sm:$0xff]
  %v16 = vld [vmem:[%s0 + $0x10] sm:$0xff]
  %v17 = vld [vmem:[%s0 + $0x18] sm:$0xff]
  %v18 = vld [vmem:[%s1] sm:$0x1]
  %v20 = vlaneseq
  %v21 = vshrl.u32 %v20, 7
  %v22 = vsub.s32 0, %v21
  %v23 = vrot.slane %v18, %v22
  %v25 = vmul.f32 %v14, %v23
  %v26 = vmul.f32 %v15, %v23
  %v27 = vmul.f32 %v16, %v23
  %v28 = vmul.f32 %v17, %v23
  %v29 = vld [vmem:[%s2] sm:$0x1]
  %v31 = vlaneseq
  %v32 = vshrl.u32 %v31, 7
  %v33 = vsub.s32 0, %v32
  %v34 = vrot.slane %v29, %v33
  %v36 = vadd.f32 %v25, %v34
  %v37 = vadd.f32 %v26, %v34
  %v38 = vadd.f32 %v27, %v34
  %v39 = vadd.f32 %v28, %v34
  %v40 = vmax.f32 %v36, 0.0
  %v41 = vmax.f32 %v37, 0.0
  %v42 = vmax.f32 %v38, 0.0
  %v43 = vmax.f32 %v39, 0.0
  %44 = vst [vmem:[%s3] sm:$0xff] %v40
  %45 = vst [vmem:[%s3 + $0x8] sm:$0xff] %v41
  %46 = vst [vmem:[%s3 + $0x10] sm:$0xff] %v42
  %47 = vst [vmem:[%s3 + $0x18] sm:$0xff] %v43
  // Predicated region
  $region14: #{_lambda_.10} parent=0 // pred_check
    _
  $region15: #{_lambda_.10} parent=0 // pred_check_branch
    %49 = sbr.rel (0) target = $region17
  $region16: #{_lambda_.10} parent=0 // pred_region
    _
  $region17: #{_lambda_.10} parent=0 // pred_fallthru
    _
  // Predicated region
  $region18: #{_lambda_.10} parent=0 // pred_check
    _
  $region19: #{_lambda_.10} parent=0 // pred_check_branch
    %51 = sbr.rel (0) target = $region21
  $region20: #{_lambda_.10} parent=0 // pred_region
    _
  $region21: #{_lambda_.10} parent=0 // pred_fallthru
    _

// kernel: _lambda_.11
$region0: #{_lambda_.11}
  #allocation0 [shape = 'u32[]', space=smem, size = 0x4, offset = 0x4, fixed_abs, tag = 'smem constant byte address 0x4 - core index']
  #allocation1 [shape = 'u32[144,128]{1,0:T(1,128)}', space=vmem, size = 0x12000, scoped, tag = 'internal scratch']
  %s0 = inlined_call_operand.vmem [shape: bf16[8,72], index: 0, kind: input, shape index: {}]
  %s1 = inlined_call_operand.vmem [shape: bf16[72,128], index: 1, kind: input, shape index: {}]
  %s2 = inlined_call_operand.vmem [shape: f32[8,128], index: 2, kind: output, shape index: {0}]
  %s3 = inlined_call_operand.vmem [shape: f32[1,2,128], index: 3, kind: output, shape index: {1}]
  %4 = xla_tuple %s2, %s3
  %s5 = sld [smem:[#allocation0]]
  $region26: #{_lambda_.11} parent=0
    _
  %s7 = ssub.s32 1, %s5
  %s8 = scalar_select 0, %s7, %s5
  // Predicated region
  $region2: #{_lambda_.11} parent=0 // pred_check
    _
  $region3: #{_lambda_.11} parent=0 // pred_check_branch
    %10 = sbr.rel (0) target = $region5
  $region4: #{_lambda_.11} parent=0 // pred_region
    _
  $region5: #{_lambda_.11} parent=0 // pred_fallthru
    _
  // Predicated region
  $region6: #{_lambda_.11} parent=0 // pred_check
    _
  $region7: #{_lambda_.11} parent=0 // pred_check_branch
    %12 = sbr.rel (0) target = $region9
  $region8: #{_lambda_.11} parent=0 // pred_region
    _
  $region9: #{_lambda_.11} parent=0 // pred_fallthru
    _
  %v14 = vld [vmem:[%s0] sm:$0xf]
  %v15 = vld [vmem:[%s1] sm:$0xf]
  %v16 = vld [vmem:[%s1 + $0x4] sm:$0xf]
  %v17 = vld [vmem:[%s1 + $0x8] sm:$0xf]
  %v18 = vld [vmem:[%s1 + $0xc] sm:$0xf]
  %v19 = vld [vmem:[%s1 + $0x10] sm:$0xf]
  %v20 = vld [vmem:[%s1 + $0x14] sm:$0xf]
  %v21 = vld [vmem:[%s1 + $0x18] sm:$0xf]
  %v22 = vld [vmem:[%s1 + $0x1c] sm:$0xf]
  %v23 = vld [vmem:[%s1 + $0x20] sm:$0xf]
  %v33 = vunpack.c.l.b16 %v15
  %v34 = vunpack.c.l.b16 %v16
  %v35 = vunpack.c.l.b16 %v17
  %v36 = vunpack.c.l.b16 %v18
  %v37 = vunpack.c.l.b16 %v19
  %v38 = vunpack.c.l.b16 %v20
  %v39 = vunpack.c.l.b16 %v21
  %v40 = vunpack.c.l.b16 %v22
  %v41 = vunpack.c.l.b16 %v23
  %v42 = vpack.c.b16 %v34, %v33
  %v43 = vpack.c.b16 %v36, %v35
  %v44 = vpack.c.b16 %v38, %v37
  %v45 = vpack.c.b16 %v40, %v39
  %v46 = vpack.c.b16 %v41, %v41
  %vm51 = vcmask 588800
  %v53 = vsel %vm51, %v14, 0
  %vm55 = vcmask 1043456
  %v57 = vsel %vm55, %v46, 0
  %59 = vmatprep.subr.bf16.mxu0 0
  %60 = vmatpush1.bf16.msra.mxu0 %v42
  %61 = vmatprep.subr.bf16.mxu0 0
  %62 = vmatpush1.bf16.msra.mxu0 %v43
  %63 = vmatprep.subr.bf16.mxu0 0
  %64 = vmatpush1.bf16.msra.mxu0 %v44
  %65 = vmatprep.subr.bf16.mxu0 0
  %66 = vmatpush1.bf16.msra.mxu0 %v45
  %67 = vmatprep.subr.bf16.mxu0 0
  %68 = vmatpush1.bf16.msra.mxu0 %v57
  %69 = vmatprep.subr.bf16.mxu0 0
  %70 = vmatpush1.bf16.msra.mxu0 0
  %71 = vmatprep.subr.bf16.mxu0 0
  %72 = vmatpush1.bf16.msra.mxu0 0
  %73 = vmatprep.subr.bf16.mxu0 0
  %74 = vmatpush1.bf16.msra.mxu0 0
  %75 = vmatprep.subr.bf16.mxu0 0
  %76 = vmatpush1.bf16.msra.mxu0 0
  %77 = vmatprep.subr.bf16.mxu0 0
  %78 = vmatpush1.bf16.msra.mxu0 0
  %79 = vmatprep.subr.bf16.mxu0 0
  %80 = vmatpush1.bf16.msra.mxu0 0
  %81 = vmatprep.subr.bf16.mxu0 0
  %82 = vmatpush1.bf16.msra.mxu0 0
  %83 = vmatprep.subr.bf16.mxu0 0
  %84 = vmatpush1.bf16.msra.mxu0 0
  %85 = vmatprep.subr.bf16.mxu0 0
  %86 = vmatpush1.bf16.msra.mxu0 0
  %87 = vmatprep.subr.bf16.mxu0 0
  %88 = vmatpush1.bf16.msra.mxu0 0
  %89 = vmatprep.subr.bf16.mxu0 0
  %90 = vmatpush1.bf16.msra.mxu0 0
  %91 = vmatprep.mubr.bf16.mxu0 0
  %92 = vmatmul.mubr.bf16.gmra.mrb[0].mxu0 %v53
  %v93 = vpop.f32.mrb[0].mxu0
  %v94 = vadd.f32 0.0, %v93
  %v95 = vpop.f32.mrb[0].mxu0
  %v96 = vpop.f32.mrb[0].mxu0
  %v97 = vpop.f32.mrb[0].mxu0
  %98 = vdwg.mxu0
  %99 = vst [vmem:[%s2] sm:$0xff] %v94
  %v100 = vrot.slane %v94, 4
  %v101 = vadd.f32 %v94, %v100
  %v102 = vrot.slane %v101, 2
  %v103 = vadd.f32 %v101, %v102
  %v104 = vrot.slane %v103, 1
  %v105 = vadd.f32 %v103, %v104
  %v106 = vmul.f32 %v94, %v94
  %v107 = vrot.slane %v106, 4
  %v108 = vadd.f32 %v106, %v107
  %v109 = vrot.slane %v108, 2
  %v110 = vadd.f32 %v108, %v109
  %v111 = vrot.slane %v110, 1
  %v112 = vadd.f32 %v110, %v111
  %vm113 = vcmask 1040384
  %v114 = vsel %vm113, %v105, %v112
  %115 = vst [vmem:[%s3] sm:$0x3] %v114
  // Predicated region
  $region10: #{_lambda_.11} parent=0 // pred_check
    _
  $region11: #{_lambda_.11} parent=0 // pred_check_branch
    %117 = sbr.rel (0) target = $region13
  $region12: #{_lambda_.11} parent=0 // pred_region
    _
  $region13: #{_lambda_.11} parent=0 // pred_fallthru
    _
  // Predicated region
  $region14: #{_lambda_.11} parent=0 // pred_check
    _
  $region15: #{_lambda_.11} parent=0 // pred_check_branch
    %119 = sbr.rel (0) target = $region17
  $region16: #{_lambda_.11} parent=0 // pred_region
    _
  $region17: #{_lambda_.11} parent=0 // pred_fallthru
    _
  // Predicated region
  $region18: #{_lambda_.11} parent=0 // pred_check
    _
  $region19: #{_lambda_.11} parent=0 // pred_check_branch
    %121 = sbr.rel (0) target = $region21
  $region20: #{_lambda_.11} parent=0 // pred_region
    _
  $region21: #{_lambda_.11} parent=0 // pred_fallthru
    _
  // Predicated region
  $region22: #{_lambda_.11} parent=0 // pred_check
    _
  $region23: #{_lambda_.11} parent=0 // pred_check_branch
    %123 = sbr.rel (0) target = $region25
  $region24: #{_lambda_.11} parent=0 // pred_region
    _
  $region25: #{_lambda_.11} parent=0 // pred_fallthru
    _

// kernel: _lambda_.12
$region0: #{_lambda_.12}
  #allocation0 [shape = 'u32[]', space=smem, size = 0x4, offset = 0x4, fixed_abs, tag = 'smem constant byte address 0x4 - core index']
  #allocation1 [shape = 'u32[144,128]{1,0:T(1,128)}', space=vmem, size = 0x12000, scoped, tag = 'internal scratch']
  %s0 = inlined_call_operand.vmem [shape: f32[8,128], index: 0, kind: input, shape index: {}]
  %s1 = inlined_call_operand.vmem [shape: f32[1,128], index: 1, kind: input, shape index: {}]
  %s2 = inlined_call_operand.vmem [shape: f32[1,128], index: 2, kind: input, shape index: {}]
  %s3 = inlined_call_operand.vmem [shape: f32[8,128], index: 3, kind: output, shape index: {}]
  %s4 = sld [smem:[#allocation0]]
  $region22: #{_lambda_.12} parent=0
    _
  %s6 = ssub.s32 1, %s4
  %s7 = scalar_select 0, %s6, %s4
  // Predicated region
  $region2: #{_lambda_.12} parent=0 // pred_check
    _
  $region3: #{_lambda_.12} parent=0 // pred_check_branch
    %9 = sbr.rel (0) target = $region5
  $region4: #{_lambda_.12} parent=0 // pred_region
    _
  $region5: #{_lambda_.12} parent=0 // pred_fallthru
    _
  // Predicated region
  $region6: #{_lambda_.12} parent=0 // pred_check
    _
  $region7: #{_lambda_.12} parent=0 // pred_check_branch
    %11 = sbr.rel (0) target = $region9
  $region8: #{_lambda_.12} parent=0 // pred_region
    _
  $region9: #{_lambda_.12} parent=0 // pred_fallthru
    _
  // Predicated region
  $region10: #{_lambda_.12} parent=0 // pred_check
    _
  $region11: #{_lambda_.12} parent=0 // pred_check_branch
    %13 = sbr.rel (0) target = $region13
  $region12: #{_lambda_.12} parent=0 // pred_region
    _
  $region13: #{_lambda_.12} parent=0 // pred_fallthru
    _
  %v14 = vld [vmem:[%s0] sm:$0xff]
  %v15 = vld [vmem:[%s1] sm:$0x1]
  %v17 = vlaneseq
  %v18 = vshrl.u32 %v17, 7
  %v19 = vsub.s32 0, %v18
  %v20 = vrot.slane %v15, %v19
  %v22 = vmul.f32 %v14, %v20
  %v23 = vld [vmem:[%s2] sm:$0x1]
  %v25 = vlaneseq
  %v26 = vshrl.u32 %v25, 7
  %v27 = vsub.s32 0, %v26
  %v28 = vrot.slane %v23, %v27
  %v30 = vadd.f32 %v22, %v28
  %v31 = vmax.f32 %v30, 0.0
  %32 = vst [vmem:[%s3] sm:$0xff] %v31
  // Predicated region
  $region14: #{_lambda_.12} parent=0 // pred_check
    _
  $region15: #{_lambda_.12} parent=0 // pred_check_branch
    %34 = sbr.rel (0) target = $region17
  $region16: #{_lambda_.12} parent=0 // pred_region
    _
  $region17: #{_lambda_.12} parent=0 // pred_fallthru
    _
  // Predicated region
  $region18: #{_lambda_.12} parent=0 // pred_check
    _
  $region19: #{_lambda_.12} parent=0 // pred_check_branch
    %36 = sbr.rel (0) target = $region21
  $region20: #{_lambda_.12} parent=0 // pred_region
    _
  $region21: #{_lambda_.12} parent=0 // pred_fallthru
    _

// kernel: _lambda_.13
$region0: #{_lambda_.13}
  #allocation0 [shape = 'u32[]', space=smem, size = 0x4, offset = 0x4, fixed_abs, tag = 'smem constant byte address 0x4 - core index']
  #allocation1 [shape = 'u32[144,128]{1,0:T(1,128)}', space=vmem, size = 0x12000, scoped, tag = 'internal scratch']
  #allocation2 [shape = 'f32[2,2,48]{2,1,0:T(2,128)}', space=vmem, size = 0x800, scoped, tag = 'scratch operand']
  #allocation3 [shape = 'f32[2,16]{1,0:T(2,128)}', space=vmem, size = 0x400, scoped, tag = 'scratch operand']
  %s0 = inlined_call_operand.vmem [shape: bf16[2,2,32], index: 0, kind: input, shape index: {}]
  %s1 = inlined_call_operand.vmem [shape: bf16[32,48], index: 1, kind: input, shape index: {}]
  %s2 = inlined_call_operand.vmem [shape: f32[16,48], index: 2, kind: input, shape index: {}]
  %s3 = inlined_call_operand.vmem [shape: f32[1,48], index: 3, kind: input, shape index: {}, may-alias: {3,4}]
  %s4 = inlined_call_operand.vmem [shape: f32[1,48], index: 4, kind: input, shape index: {}, may-alias: {3,4}]
  %s5 = inlined_call_operand.vmem [shape: f32[2,2,16], index: 5, kind: output, shape index: {0}]
  %s6 = inlined_call_operand.hbm [shape: f32[2,16], index: 6, kind: output, shape index: {1}]
  %7 = xla_tuple %s5, %s6
  %s8 = sld [smem:[#allocation0]]
  $region38: #{_lambda_.13} parent=0
    _
  %s10 = ssub.s32 1, %s8
  %s11 = scalar_select 0, %s10, %s8
  $region1: #{_lambda_.13} parent=0
    #allocation4 [shape = 'u8[1024]{0}', space=vmem, size = 0x400, scoped, tag = 'output window, operand 1, single buffered']
    #allocation5 [shape = 's32[1]{0}', space=sflag, size = 0x4, scoped, tag = 'scoped memory for _lambda_.13']
    %12 = vsyncpa [#allocation5], 0
    // Predicated region
    $region2: #{_lambda_.13} parent=1 // pred_check
      _
    $region3: #{_lambda_.13} parent=1 // pred_check_branch
      %14 = sbr.rel (0) target = $region5
    $region4: #{_lambda_.13} parent=1 // pred_region
      _
    $region5: #{_lambda_.13} parent=1 // pred_fallthru
      _
    // Predicated region
    $region6: #{_lambda_.13} parent=1 // pred_check
      _
    $region7: #{_lambda_.13} parent=1 // pred_check_branch
      %16 = sbr.rel (0) target = $region9
    $region8: #{_lambda_.13} parent=1 // pred_region
      _
    $region9: #{_lambda_.13} parent=1 // pred_fallthru
      _
    // Predicated region
    $region10: #{_lambda_.13} parent=1 // pred_check
      _
    $region11: #{_lambda_.13} parent=1 // pred_check_branch
      %18 = sbr.rel (0) target = $region13
    $region12: #{_lambda_.13} parent=1 // pred_region
      _
    $region13: #{_lambda_.13} parent=1 // pred_fallthru
      _
    // Predicated region
    $region14: #{_lambda_.13} parent=1 // pred_check
      _
    $region15: #{_lambda_.13} parent=1 // pred_check_branch
      %20 = sbr.rel (0) target = $region17
    $region16: #{_lambda_.13} parent=1 // pred_region
      _
    $region17: #{_lambda_.13} parent=1 // pred_fallthru
      _
    // Predicated region
    $region18: #{_lambda_.13} parent=1 // pred_check
      _
    $region19: #{_lambda_.13} parent=1 // pred_check_branch
      %22 = sbr.rel (0) target = $region21
    $region20: #{_lambda_.13} parent=1 // pred_region
      _
    $region21: #{_lambda_.13} parent=1 // pred_fallthru
      _
    %v24 = vld [vmem:[%s0] sm:$0x1]
    %v25 = vld [vmem:[%s0 + $0x1] sm:$0x1]
    %v26 = vld [vmem:[%s1] sm:$0xf]
    %v27 = vld [vmem:[%s1 + $0x4] sm:$0xf]
    %v28 = vld [vmem:[%s1 + $0x8] sm:$0xf]
    %v29 = vld [vmem:[%s1 + $0xc] sm:$0xf]
    %v32 = vcombine.low %v24, %v25
    %v34 = vunpack.c.l.s4 1966171168
    %v35 = vunpack.c.0.s8 %v34
    %v36 = vlaneseq
    %v37 = vshrl.u32 %v36, 7
    %v38 = vsub.s32 %v35, %v37
    %v39 = vrot.slane %v32, %v38
    %v41 = vunpack.c.l.s4 1966171168
    %v42 = vunpack.c.0.s8 %v41
    %v43 = vlaneseq
    %v44 = vshrl.u32 %v43, 7
    %v45 = vsub.s32 %v42, %v44
    %v46 = vrot.slane %v39, %v45
    %v51 = vunpack.c.l.b16 %v26
    %v52 = vunpack.c.l.b16 %v27
    %v53 = vunpack.c.l.b16 %v28
    %v54 = vunpack.c.l.b16 %v29
    %v55 = vpack.c.b16 %v52, %v51
    %v56 = vpack.c.b16 %v54, %v53
    %vm59 = vcmask 261120
    %v61 = vsel %vm59, %v46, 0
    %63 = vmatprep.subr.bf16.mxu0 0
    %64 = vmatpush1.bf16.msra.mxu0 %v55
    %65 = vmatprep.subr.bf16.mxu0 0
    %66 = vmatpush1.bf16.msra.mxu0 %v56
    %67 = vmatprep.subr.bf16.mxu0 0
    %68 = vmatpush1.bf16.msra.mxu0 0
    %69 = vmatprep.subr.bf16.mxu0 0
    %70 = vmatpush1.bf16.msra.mxu0 0
    %71 = vmatprep.subr.bf16.mxu0 0
    %72 = vmatpush1.bf16.msra.mxu0 0
    %73 = vmatprep.subr.bf16.mxu0 0
    %74 = vmatpush1.bf16.msra.mxu0 0
    %75 = vmatprep.subr.bf16.mxu0 0
    %76 = vmatpush1.bf16.msra.mxu0 0
    %77 = vmatprep.subr.bf16.mxu0 0
    %78 = vmatpush1.bf16.msra.mxu0 0
    %79 = vmatprep.subr.bf16.mxu0 0
    %80 = vmatpush1.bf16.msra.mxu0 0
    %81 = vmatprep.subr.bf16.mxu0 0
    %82 = vmatpush1.bf16.msra.mxu0 0
    %83 = vmatprep.subr.bf16.mxu0 0
    %84 = vmatpush1.bf16.msra.mxu0 0
    %85 = vmatprep.subr.bf16.mxu0 0
    %86 = vmatpush1.bf16.msra.mxu0 0
    %87 = vmatprep.subr.bf16.mxu0 0
    %88 = vmatpush1.bf16.msra.mxu0 0
    %89 = vmatprep.subr.bf16.mxu0 0
    %90 = vmatpush1.bf16.msra.mxu0 0
    %91 = vmatprep.subr.bf16.mxu0 0
    %92 = vmatpush1.bf16.msra.mxu0 0
    %93 = vmatprep.subr.bf16.mxu0 0
    %94 = vmatpush1.bf16.msra.mxu0 0
    %95 = vmatprep.mubr.bf16.mxu0 0
    %96 = vmatmul.mubr.bf16.gmra.mrb[0].mxu0 %v61
    %v97 = vpop.f32.mrb[0].mxu0
    %v98 = vadd.f32 0.0, %v97
    %v99 = vpop.f32.mrb[0].mxu0
    %v100 = vpop.f32.mrb[0].mxu0
    %v101 = vpop.f32.mrb[0].mxu0
    %102 = vdwg.mxu0
    %v105 = vunpack.c.l.s4 1983009808
    %v106 = vunpack.c.0.s8 %v105
    %v107 = vlaneseq
    %v108 = vshrl.u32 %v107, 7
    %v109 = vsub.s32 %v106, %v108
    %v110 = vrot.slane %v98, %v109
    %v111 = vcombine.high %v110, %v110
    %v114 = vld [vmem:[%s3] sm:$0x1]
    %v116 = vlaneseq
    %v117 = vshrl.u32 %v116, 7
    %v118 = vsub.s32 0, %v117
    %v119 = vrot.slane %v114, %v118
    %v121 = vadd.f32 %v110, %v119
    %v122 = vadd.f32 %v111, %v119
    %vm123 = vcmask 386048
    %124 = vst.msk [vmem:[#allocation2] sm:$0x3] %vm123, %v121
    %125 = vst.msk [vmem:[#allocation2 + $0x2] sm:$0x3] %vm123, %v122
    %vm126 = vcmask 123904
    %127 = vst.msk [vmem:[#allocation3] sm:$0x3] %vm126, 0.0
    %v128 = vld [vmem:[#allocation3] sm:$0x3]
    %v129 = vld [vmem:[#allocation2] sm:$0x3]
    %v130 = vld [vmem:[%s2] sm:$0xff]
    %v131 = vld [vmem:[%s2 + $0x8] sm:$0xff]
    %v132 = vld [vmem:[%s4] sm:$0x1]
    %v134 = vlaneseq
    %v135 = vshrl.u32 %v134, 7
    %v136 = vsub.s32 0, %v135
    %v137 = vrot.slane %v132, %v136
    %vm139 = vcmask 130048
    %v141 = vsel %vm139, %v128, 0
    %143 = vmatprep.subr.mxu0 0.0
    %144 = vmatpush1.msra.mxu0 %v130
    %145 = vmatprep.subr.mxu0 0.0
    %146 = vmatpush1.msra.mxu0 %v131
    %147 = vmatprep.subr.mxu0 0.0
    %148 = vmatpush1.msra.mxu0 0.0
    %149 = vmatprep.subr.mxu0 0.0
    %150 = vmatpush1.msra.mxu0 0.0
    %151 = vmatprep.subr.mxu0 0.0
    %152 = vmatpush1.msra.mxu0 0.0
    %153 = vmatprep.subr.mxu0 0.0
    %154 = vmatpush1.msra.mxu0 0.0
    %155 = vmatprep.subr.mxu0 0.0
    %156 = vmatpush1.msra.mxu0 0.0
    %157 = vmatprep.subr.mxu0 0.0
    %158 = vmatpush1.msra.mxu0 0.0
    %159 = vmatprep.subr.mxu0 0.0
    %160 = vmatpush1.msra.mxu0 0.0
    %161 = vmatprep.subr.mxu0 0.0
    %162 = vmatpush1.msra.mxu0 0.0
    %163 = vmatprep.subr.mxu0 0.0
    %164 = vmatpush1.msra.mxu0 0.0
    %165 = vmatprep.subr.mxu0 0.0
    %166 = vmatpush1.msra.mxu0 0.0
    %167 = vmatprep.subr.mxu0 0.0
    %168 = vmatpush1.msra.mxu0 0.0
    %169 = vmatprep.subr.mxu0 0.0
    %170 = vmatpush1.msra.mxu0 0.0
    %171 = vmatprep.subr.mxu0 0.0
    %172 = vmatpush1.msra.mxu0 0.0
    %173 = vmatprep.subr.mxu0 0.0
    %174 = vmatpush1.msra.mxu0 0.0
    %175 = vmatprep.subr.mxu0 0.0
    %176 = vmatpush1.msra.mxu0 0.0
    %177 = vmatprep.subr.mxu0 0.0
    %178 = vmatpush1.msra.mxu0 0.0
    %179 = vmatprep.subr.mxu0 0.0
    %180 = vmatpush1.msra.mxu0 0.0
    %181 = vmatprep.subr.mxu0 0.0
    %182 = vmatpush1.msra.mxu0 0.0
    %183 = vmatprep.subr.mxu0 0.0
    %184 = vmatpush1.msra.mxu0 0.0
    %185 = vmatprep.subr.mxu0 0.0
    %186 = vmatpush1.msra.mxu0 0.0
    %187 = vmatprep.subr.mxu0 0.0
    %188 = vmatpush1.msra.mxu0 0.0
    %189 = vmatprep.subr.mxu0 0.0
    %190 = vmatpush1.msra.mxu0 0.0
    %191 = vmatprep.subr.mxu0 0.0
    %192 = vmatpush1.msra.mxu0 0.0
    %193 = vmatprep.subr.mxu0 0.0
    %194 = vmatpush1.msra.mxu0 0.0
    %195 = vmatprep.subr.mxu0 0.0
    %196 = vmatpush1.msra.mxu0 0.0
    %197 = vmatprep.subr.mxu0 0.0
    %198 = vmatpush1.msra.mxu0 0.0
    %199 = vmatprep.subr.mxu0 0.0
    %200 = vmatpush1.msra.mxu0 0.0
    %201 = vmatprep.subr.mxu0 0.0
    %202 = vmatpush1.msra.mxu0 0.0
    %203 = vmatprep.subr.mxu0 0.0
    %204 = vmatpush1.msra.mxu0 0.0
    %205 = vmatprep.subr.mxu0 0.0
    %206 = vmatpush1.msra.mxu0 0.0
    %207 = vmatprep.mubr.f32.mxu0 0.0
    %208 = vmatmul.mubr.f32.gmra.mrb[0].mxu0 %v141
    %v209 = vpop.f32.mrb[0].mxu0
    %v210 = vadd.f32 %v137, %v209
    %v211 = vpop.f32.mrb[0].mxu0
    %212 = vdwg.mxu0
    %v213 = vadd.f32 %v129, %v210
    %v214 = vxor.u32 %v213, 2147483648
    %v215 = vmul.f32 %v214, 1.442695
    %v216 = vpow.pop %v215
    %v217 = vadd.f32 %v216, 1.0
    %v218 = vrcp.pop %v217
    %v219 = vmul.f32 1.0, %v218
    %221 = vrot.lane.b32.xlu0 %v210, 96
    %v222 = vpop.permute.xlu0 %221
    %v224 = vmul.f32 %v219, %v222
    %226 = vrot.lane.b32.xlu0 %v224, 32
    %v227 = vpop.permute.xlu0 %226
    %v229 = vadd.f32 %v129, %v227
    %v230 = vtanh.pop %v229
    %v231 = vsub.f32 1.0, %v219
    %233 = vrot.lane.b32.xlu0 %v230, 112
    %v234 = vpop.permute.xlu0 %233
    %v236 = vmul.f32 %v231, %v234
    %237 = vrot.lane.b32.xlu0 %v128, 16
    %v238 = vpop.permute.xlu0 %237
    %v240 = vmul.f32 %v219, %v238
    %v241 = vadd.f32 %v236, %v240
    %243 = vrot.lane.b32.xlu0 %v241, 112
    %v244 = vpop.permute.xlu0 %243
    %246 = vst.msk [vmem:[#allocation3] sm:$0x3] %vm126, %v244
    %247 = vst.msk [vmem:[%s5] sm:$0x3] %vm126, %v244
    %v248 = vld [vmem:[#allocation3] sm:$0x3]
    %s249 = scalar_lea.vmem [#allocation2], 2
    %v250 = vld [vmem:[%s249] sm:$0x3]
    %v251 = vld [vmem:[%s2] sm:$0xff]
    %v252 = vld [vmem:[%s2 + $0x8] sm:$0xff]
    %v253 = vld [vmem:[%s4] sm:$0x1]
    %v255 = vlaneseq
    %v256 = vshrl.u32 %v255, 7
    %v257 = vsub.s32 0, %v256
    %v258 = vrot.slane %v253, %v257
    %v261 = vsel %vm139, %v248, 0
    %263 = vmatprep.subr.mxu0 0.0
    %264 = vmatpush1.msra.mxu0 %v251
    %265 = vmatprep.subr.mxu0 0.0
    %266 = vmatpush1.msra.mxu0 %v252
    %267 = vmatprep.subr.mxu0 0.0
    %268 = vmatpush1.msra.mxu0 0.0
    %269 = vmatprep.subr.mxu0 0.0
    %270 = vmatpush1.msra.mxu0 0.0
    %271 = vmatprep.subr.mxu0 0.0
    %272 = vmatpush1.msra.mxu0 0.0
    %273 = vmatprep.subr.mxu0 0.0
    %274 = vmatpush1.msra.mxu0 0.0
    %275 = vmatprep.subr.mxu0 0.0
    %276 = vmatpush1.msra.mxu0 0.0
    %277 = vmatprep.subr.mxu0 0.0
    %278 = vmatpush1.msra.mxu0 0.0
    %279 = vmatprep.subr.mxu0 0.0
    %280 = vmatpush1.msra.mxu0 0.0
    %281 = vmatprep.subr.mxu0 0.0
    %282 = vmatpush1.msra.mxu0 0.0
    %283 = vmatprep.subr.mxu0 0.0
    %284 = vmatpush1.msra.mxu0 0.0
    %285 = vmatprep.subr.mxu0 0.0
    %286 = vmatpush1.msra.mxu0 0.0
    %287 = vmatprep.subr.mxu0 0.0
    %288 = vmatpush1.msra.mxu0 0.0
    %289 = vmatprep.subr.mxu0 0.0
    %290 = vmatpush1.msra.mxu0 0.0
    %291 = vmatprep.subr.mxu0 0.0
    %292 = vmatpush1.msra.mxu0 0.0
    %293 = vmatprep.subr.mxu0 0.0
    %294 = vmatpush1.msra.mxu0 0.0
    %295 = vmatprep.subr.mxu0 0.0
    %296 = vmatpush1.msra.mxu0 0.0
    %297 = vmatprep.subr.mxu0 0.0
    %298 = vmatpush1.msra.mxu0 0.0
    %299 = vmatprep.subr.mxu0 0.0
    %300 = vmatpush1.msra.mxu0 0.0
    %301 = vmatprep.subr.mxu0 0.0
    %302 = vmatpush1.msra.mxu0 0.0
    %303 = vmatprep.subr.mxu0 0.0
    %304 = vmatpush1.msra.mxu0 0.0
    %305 = vmatprep.subr.mxu0 0.0
    %306 = vmatpush1.msra.mxu0 0.0
    %307 = vmatprep.subr.mxu0 0.0
    %308 = vmatpush1.msra.mxu0 0.0
    %309 = vmatprep.subr.mxu0 0.0
    %310 = vmatpush1.msra.mxu0 0.0
    %311 = vmatprep.subr.mxu0 0.0
    %312 = vmatpush1.msra.mxu0 0.0
    %313 = vmatprep.subr.mxu0 0.0
    %314 = vmatpush1.msra.mxu0 0.0
    %315 = vmatprep.subr.mxu0 0.0
    %316 = vmatpush1.msra.mxu0 0.0
    %317 = vmatprep.subr.mxu0 0.0
    %318 = vmatpush1.msra.mxu0 0.0
    %319 = vmatprep.subr.mxu0 0.0
    %320 = vmatpush1.msra.mxu0 0.0
    %321 = vmatprep.subr.mxu0 0.0
    %322 = vmatpush1.msra.mxu0 0.0
    %323 = vmatprep.subr.mxu0 0.0
    %324 = vmatpush1.msra.mxu0 0.0
    %325 = vmatprep.subr.mxu0 0.0
    %326 = vmatpush1.msra.mxu0 0.0
    %327 = vmatprep.mubr.f32.mxu0 0.0
    %328 = vmatmul.mubr.f32.gmra.mrb[0].mxu0 %v261
    %v329 = vpop.f32.mrb[0].mxu0
    %v330 = vadd.f32 %v258, %v329
    %v331 = vpop.f32.mrb[0].mxu0
    %332 = vdwg.mxu0
    %v333 = vadd.f32 %v250, %v330
    %v334 = vxor.u32 %v333, 2147483648
    %v335 = vmul.f32 %v334, 1.442695
    %v336 = vpow.pop %v335
    %v337 = vadd.f32 %v336, 1.0
    %v338 = vrcp.pop %v337
    %v339 = vmul.f32 1.0, %v338
    %341 = vrot.lane.b32.xlu0 %v330, 96
    %v342 = vpop.permute.xlu0 %341
    %v344 = vmul.f32 %v339, %v342
    %346 = vrot.lane.b32.xlu0 %v344, 32
    %v347 = vpop.permute.xlu0 %346
    %v349 = vadd.f32 %v250, %v347
    %v350 = vtanh.pop %v349
    %v351 = vsub.f32 1.0, %v339
    %353 = vrot.lane.b32.xlu0 %v350, 112
    %v354 = vpop.permute.xlu0 %353
    %v356 = vmul.f32 %v351, %v354
    %357 = vrot.lane.b32.xlu0 %v248, 16
    %v358 = vpop.permute.xlu0 %357
    %v360 = vmul.f32 %v339, %v358
    %v361 = vadd.f32 %v356, %v360
    %363 = vrot.lane.b32.xlu0 %v361, 112
    %v364 = vpop.permute.xlu0 %363
    %366 = vst.msk [vmem:[#allocation3] sm:$0x3] %vm126, %v364
    %s367 = scalar_lea.vmem %s5, 2
    %368 = vst.msk [vmem:[%s367] sm:$0x3] %vm126, %v364
    %v369 = vld [vmem:[#allocation3] sm:$0x3]
    %370 = vst.msk [vmem:[#allocation4] sm:$0x3] %vm126, %v369
    // Predicated region
    $region22: #{_lambda_.13} parent=1 // pred_check
      _
    $region23: #{_lambda_.13} parent=1 // pred_check_branch
      %372 = sbr.rel (0) target = $region25
    $region24: #{_lambda_.13} parent=1 // pred_region
      _
    $region25: #{_lambda_.13} parent=1 // pred_fallthru
      _
    // Predicated region
    $region26: #{_lambda_.13} parent=1 // pred_check
      _
    $region27: #{_lambda_.13} parent=1 // pred_check_branch
      %374 = sbr.rel (0) target = $region29
    $region28: #{_lambda_.13} parent=1 // pred_region
      %s376 = ssub.s32 32, 32
      %377 = vsyncadd [#allocation5], %s376
      %s379 = sshll.u32 [#allocation4], 4
      %s380 = int_to_ptr.vmem [resolvable:$true] %s379
      %382 = dma.vmem_to_hbm [thread:$0]  %s380, 32, %s6, [#allocation5]
    $region29: #{_lambda_.13} parent=1 // pred_fallthru
      _
    // Predicated region
    $region30: #{_lambda_.13} parent=1 // pred_check
      _
    $region31: #{_lambda_.13} parent=1 // pred_check_branch
      %384 = sbr.rel (0) target = $region33
    $region32: #{_lambda_.13} parent=1 // pred_region
      _
    $region33: #{_lambda_.13} parent=1 // pred_fallthru
      _
    // Predicated region
    $region34: #{_lambda_.13} parent=1 // pred_check
      _
    $region35: #{_lambda_.13} parent=1 // pred_check_branch
      %386 = sbr.rel (0) target = $region37
    $region36: #{_lambda_.13} parent=1 // pred_region
      %387 = dma.done [#allocation5], 32
    $region37: #{_lambda_.13} parent=1 // pred_fallthru
      _
    %388 = vsyncpa [#allocation5], 1

</llo_original>
